<compile_context>
chip_gen: v7x
topology: tpu7x:2x2x1
jax: 0.10.0
libtpu: 0.0.40
codegen_flags: <defaults>
</compile_context>

<pallas_src>
import functools

import jax
import jax.numpy as jnp
from jax import lax
from jax.experimental import pallas as pl
from jax.experimental.pallas import tpu as pltpu


# ---------------------------------------------------------------------------
# Fused kernel: attention matmul + gradient_net MLP + fc + concat
# ---------------------------------------------------------------------------
def _fused_kernel(y_ref, w1_ref, b1_ref, w2_ref, b2_ref, wfc3_ref, bfc_ref,
                  o_ref, *, n, m, s, backwards):
    # ---- attention product, batched over the N trajectory samples ----------
    y = y_ref[...]                                   # (N, S0, S)
    h_y = y[:, :m, :]                                # (N, M, S)
    a_y = y[:, m:, :]                                # (N, S, S)
    # Reference also computes softmax(a_y, dim=1) but never uses it -> skipped.
    # h_ = transpose(a_y @ h_y^T, 1, 2) == h_y @ a_y^T  (batched over samples)
    h = lax.dot_general(h_y, a_y, (((2,), (2,)), ((0,), (0,))),
                        preferred_element_type=jnp.float32)       # (N, M, S)

    # ---- gradient_net MLP, batched over all N*M rows (2 matmuls total) -----
    # Leading-dim collapse only (layout preserving; M and N*M are sublane
    # multiples of 8 for the test shapes).
    h2 = h.reshape(n * m, s)                         # (N*M, S)
    x1 = jnp.tanh(jnp.dot(h2, w1_ref[...], preferred_element_type=jnp.float32)
                  + b1_ref[...])                     # (N*M, H)
    g = jnp.dot(x1, w2_ref[...],
                preferred_element_type=jnp.float32) + b2_ref[...]  # (N*M, S)
    if backwards:
        # PyTorch negates grad / grad2 BEFORE applying self.fc -> same here.
        g = -g

    grad3 = g.reshape(n, m, s)                       # (N, M, S)
    # rows [0:M) of the output = grad  (single aligned store)
    o_ref[:, :m, :] = grad3.astype(o_ref.dtype)

    # ---- fc: (N, M*S) @ (M*S, S*S) + b, decomposed as a sum over M ---------
    # fc_out[nn, k] = sum_i sum_j grad[nn, i, j] * Wfc_t[i*S + j, k] + bfc[k]
    # wfc3[i] is the (S, S*S) slab Wfc_t[i*S:(i+1)*S, :] (reshaped host-side),
    # so every term is a plain 2-D MXU matmul; no in-kernel minor-dim flatten.
    acc = jnp.zeros((n, s * s), dtype=jnp.float32)
    for i in range(m):                               # static unroll, M is small
        row = lax.slice_in_dim(grad3, i, i + 1, axis=1)   # (N, 1, S)
        row = row.reshape(n, s)                           # (N, S)
        acc = acc + jnp.dot(row, wfc3_ref[i],
                            preferred_element_type=jnp.float32)    # (N, S*S)
    fc_out = acc + bfc_ref[...]                      # (N, S*S)

    # scatter fc_out (row-major view as (N, S, S)) into output rows [M:S0).
    # Done as (1, S) stores with integer leading index + sublane slice, the
    # one store pattern guaranteed to lower on Mosaic for this layout.
    for j in range(s):
        row_blk = fc_out[:, j * s:(j + 1) * s]       # (N, S)
        for nn in range(n):
            o_ref[nn, m + j:m + j + 1, :] = (
                row_blk[nn:nn + 1, :].astype(o_ref.dtype))


def _build_forward(n, s0, s, hdim, backwards):
    m = s0 - s
    kernel = functools.partial(_fused_kernel, n=n, m=m, s=s, backwards=backwards)
    flops = int(2 * n * m * s * s                 # attention h_y @ a_y^T
                + 2 * n * m * s * hdim            # Linear(S->H)
                + 2 * n * m * hdim * s            # Linear(H->S)
                + 2 * n * (m * s) * (s * s))      # fc Linear(M*S -> S*S)
    transcendentals = int(n * m * hdim)           # tanh
    bytes_accessed = int(4 * (2 * n * s0 * s + s * hdim + hdim + hdim * s + s
                              + m * s * s * s + s * s))
    return pl.pallas_call(
        kernel,
        out_shape=jax.ShapeDtypeStruct((n, s0, s), jnp.float32),
        grid=(1,),
        in_specs=[
            pl.BlockSpec((n, s0, s), lambda i: (0, 0, 0)),      # y
            pl.BlockSpec((s, hdim), lambda i: (0, 0)),          # W1
            pl.BlockSpec((1, hdim), lambda i: (0, 0)),          # b1
            pl.BlockSpec((hdim, s), lambda i: (0, 0)),          # W2
            pl.BlockSpec((1, s), lambda i: (0, 0)),             # b2
            pl.BlockSpec((m, s, s * s), lambda i: (0, 0, 0)),   # Wfc (M,S,S*S)
            pl.BlockSpec((1, s * s), lambda i: (0, 0)),         # bfc
        ],
        out_specs=pl.BlockSpec((n, s0, s), lambda i: (0, 0, 0)),
        compiler_params=pltpu.CompilerParams(
            dimension_semantics=("arbitrary",)),
        cost_estimate=pl.CostEstimate(flops=flops,
                                      transcendentals=transcendentals,
                                      bytes_accessed=bytes_accessed),
    )


# ---------------------------------------------------------------------------
# Module wrapper
# ---------------------------------------------------------------------------
class ODEFuncAttentionPallas:
    def __init__(self, input_dim, latent_dim, n_traj_samples, hidden_units, key):
        self.input_dim = input_dim
        self.latent_dim = latent_dim
        self.n_traj_samples = n_traj_samples
        self.hidden_units = hidden_units
        s, h = latent_dim, hidden_units
        k1, k2, k3 = jax.random.split(key, 3)
        # gradient_net == gradient_net_at (same module object in the reference).
        # init_network_weights style: weight ~ N(0, 0.1), bias = 0.
        self.w1 = 0.1 * jax.random.normal(k1, (s, h), dtype=jnp.float32)
        self.b1 = jnp.zeros((1, h), dtype=jnp.float32)
        self.w2 = 0.1 * jax.random.normal(k2, (h, s), dtype=jnp.float32)
        self.b2 = jnp.zeros((1, s), dtype=jnp.float32)
        # TODO(synk): the reference re-creates self.fc with fresh random weights
        # inside every forward(); here it is built once per (M, S) and cached,
        # so call-for-call numerics cannot match PyTorch's per-call randomness.
        self._fc_key = k3
        self._fc_cache = {}
        self._call_cache = {}

    def _get_fc(self, m, s):
        key = (m, s)
        if key not in self._fc_cache:
            din, dout = m * s, s * s
            kw, kb = jax.random.split(jax.random.fold_in(self._fc_key,
                                                         m * 1000 + s))
            bound = 1.0 / (din ** 0.5)
            # Stored directly in "x @ W + b" orientation: (din, dout).
            wfc_t = jax.random.uniform(kw, (din, dout), jnp.float32, -bound, bound)
            bfc = jax.random.uniform(kb, (1, dout), jnp.float32, -bound, bound)
            wfc3 = wfc_t.reshape(m, s, dout)   # (M, S, S*S) slabs for the kernel
            self._fc_cache[key] = (wfc_t, wfc3, bfc)
        return self._fc_cache[key]

    def _get_call(self, n, s0, s, backwards):
        key = (n, s0, s, self.hidden_units, bool(backwards))
        if key not in self._call_cache:
            self._call_cache[key] = _build_forward(n, s0, s, self.hidden_units,
                                                   bool(backwards))
        return self._call_cache[key]

    def __call__(self, t_local, y, backwards=False):
        del t_local  # unused in the reference forward as well
        n, s0, s = y.shape
        assert n == self.n_traj_samples
        assert s0 > s, "y must contain the S x S attention block below the latents"
        m = s0 - s
        _, wfc3, bfc = self._get_fc(m, s)
        fwd = self._get_call(n, s0, s, backwards)
        return fwd(y, self.w1, self.b1, self.w2, self.b2, wfc3, bfc)


# ---------------------------------------------------------------------------
# Pure-JAX reference for a sanity check
# ---------------------------------------------------------------------------
def reference_forward(model, y, backwards=False):
    n, s0, s = y.shape
    m = s0 - s
    h_y = y[:, :m, :]
    a_y = y[:, m:, :]
    h_ = jnp.einsum('nis,njs->nij', h_y, a_y)        # == transpose(a_y @ h_y^T, 1, 2)
    grad = jnp.tanh(h_ @ model.w1 + model.b1) @ model.w2 + model.b2
    grad2 = grad
    if backwards:
        grad = -grad
        grad2 = -grad2
    wfc_t, _, bfc = model._get_fc(m, s)
    fc_out = grad2.reshape(n, m * s) @ wfc_t + bfc
    return jnp.concatenate([grad, fc_out.reshape(n, s, s)], axis=1)


if __name__ == "__main__":
    key = jax.random.PRNGKey(0)
    k_y, k_p = jax.random.split(key)

    # Shapes consistent with the forward: y is (n_traj_samples, S0, S), S0 > S.
    N, S0, S, H = 3, 24, 8, 32

    model = ODEFuncAttentionPallas(input_dim=S, latent_dim=S, n_traj_samples=N,
                                   hidden_units=H, key=k_p)

    y = jax.random.normal(k_y, (N, S0, S), dtype=jnp.float32)
    t_local = jnp.float32(0.5)

    out = jax.block_until_ready(model(t_local, y))
    assert out.shape == (N, S0, S), out.shape
    ref = reference_forward(model, y)
    assert jnp.allclose(out, ref, rtol=2e-2, atol=2e-3), \
        float(jnp.max(jnp.abs(out - ref)))

    out_b = jax.block_until_ready(model(t_local, y, backwards=True))
    ref_b = reference_forward(model, y, backwards=True)
    assert jnp.allclose(out_b, ref_b, rtol=2e-2, atol=2e-3), \
        float(jnp.max(jnp.abs(out_b - ref_b)))

    print("KERNEL_OK")
</pallas_src>

<mosaic_0001>
module attributes {stable_mosaic.version = 11 : i64} {
  func.func @_fused_kernel(%arg0: i32, %arg1: memref<3x24x8xf32, #tpu.memory_space<vmem>>, %arg2: memref<8x32xf32, #tpu.memory_space<vmem>>, %arg3: memref<1x32xf32, #tpu.memory_space<vmem>>, %arg4: memref<32x8xf32, #tpu.memory_space<vmem>>, %arg5: memref<1x8xf32, #tpu.memory_space<vmem>>, %arg6: memref<16x8x64xf32, #tpu.memory_space<vmem>>, %arg7: memref<1x64xf32, #tpu.memory_space<vmem>>, %arg8: memref<3x24x8xf32, #tpu.memory_space<vmem>>) attributes {dimension_semantics = [#tpu.dimension_semantics<arbitrary>], iteration_bounds = array<i64: 1>, scalar_prefetch = 0 : i64, scratch_operands = 0 : i64, tpu.core_type = #tpu.core_type<tc>, window_params = [{pipeline_mode = #tpu.pipeline_mode<synchronous>, transform_indices = @transform_0, window_bounds = array<i64: 3, 24, 8>}, {pipeline_mode = #tpu.pipeline_mode<synchronous>, transform_indices = @transform_1, window_bounds = array<i64: 8, 32>}, {pipeline_mode = #tpu.pipeline_mode<synchronous>, transform_indices = @transform_2, window_bounds = array<i64: 1, 32>}, {pipeline_mode = #tpu.pipeline_mode<synchronous>, transform_indices = @transform_3, window_bounds = array<i64: 32, 8>}, {pipeline_mode = #tpu.pipeline_mode<synchronous>, transform_indices = @transform_4, window_bounds = array<i64: 1, 8>}, {pipeline_mode = #tpu.pipeline_mode<synchronous>, transform_indices = @transform_5, window_bounds = array<i64: 16, 8, 64>}, {pipeline_mode = #tpu.pipeline_mode<synchronous>, transform_indices = @transform_6, window_bounds = array<i64: 1, 64>}, {pipeline_mode = #tpu.pipeline_mode<synchronous>, transform_indices = @transform_7, window_bounds = array<i64: 3, 24, 8>}]} {
    %c0 = arith.constant 0 : index
    %c0_0 = arith.constant 0 : index
    %c0_1 = arith.constant 0 : index
    %0 = vector.load %arg1[%c0, %c0_0, %c0_1] : memref<3x24x8xf32, #tpu.memory_space<vmem>>, vector<3x24x8xf32>
    %1 = vector.extract_strided_slice %0 {offsets = [0, 0, 0], sizes = [3, 16, 8], strides = [1, 1, 1]} : vector<3x24x8xf32> to vector<3x16x8xf32>
    %2 = vector.extract_strided_slice %0 {offsets = [0, 16, 0], sizes = [3, 8, 8], strides = [1, 1, 1]} : vector<3x24x8xf32> to vector<3x8x8xf32>
    %cst = arith.constant dense<0.000000e+00> : vector<3x16x8xf32>
    %3 = tpu.matmul %1, %2, %cst {dimension_numbers = #tpu.dot_dimension_numbers<[2], [2], [1], [1], [0, 0, 0, 1, 1, 1], [0], [0]>} : vector<3x16x8xf32>, vector<3x8x8xf32>, vector<3x16x8xf32> -> vector<3x16x8xf32>
    %4 = vector.shape_cast %3 : vector<3x16x8xf32> to vector<48x8xf32>
    %c0_2 = arith.constant 0 : index
    %c0_3 = arith.constant 0 : index
    %5 = vector.load %arg2[%c0_2, %c0_3] : memref<8x32xf32, #tpu.memory_space<vmem>>, vector<8x32xf32>
    %cst_4 = arith.constant dense<0.000000e+00> : vector<48x32xf32>
    %6 = tpu.matmul %4, %5, %cst_4 {dimension_numbers = #tpu.dot_dimension_numbers<[1], [0], [0], [1], [0, 0, 1, 1], [], []>} : vector<48x8xf32>, vector<8x32xf32>, vector<48x32xf32> -> vector<48x32xf32>
    %c0_5 = arith.constant 0 : index
    %c0_6 = arith.constant 0 : index
    %7 = vector.load %arg3[%c0_5, %c0_6] : memref<1x32xf32, #tpu.memory_space<vmem>>, vector<1x32xf32>
    %8 = vector.broadcast %7 : vector<1x32xf32> to vector<48x32xf32>
    %9 = arith.addf %6, %8 : vector<48x32xf32>
    %10 = math.tanh %9 : vector<48x32xf32>
    %c0_7 = arith.constant 0 : index
    %c0_8 = arith.constant 0 : index
    %11 = vector.load %arg4[%c0_7, %c0_8] : memref<32x8xf32, #tpu.memory_space<vmem>>, vector<32x8xf32>
    %cst_9 = arith.constant dense<0.000000e+00> : vector<48x8xf32>
    %12 = tpu.matmul %10, %11, %cst_9 {dimension_numbers = #tpu.dot_dimension_numbers<[1], [0], [0], [1], [0, 0, 1, 1], [], []>} : vector<48x32xf32>, vector<32x8xf32>, vector<48x8xf32> -> vector<48x8xf32>
    %c0_10 = arith.constant 0 : index
    %c0_11 = arith.constant 0 : index
    %13 = vector.load %arg5[%c0_10, %c0_11] : memref<1x8xf32, #tpu.memory_space<vmem>>, vector<1x8xf32>
    %14 = vector.broadcast %13 : vector<1x8xf32> to vector<48x8xf32>
    %15 = arith.addf %12, %14 : vector<48x8xf32>
    %16 = vector.shape_cast %15 : vector<48x8xf32> to vector<3x16x8xf32>
    %c0_12 = arith.constant 0 : index
    %c0_13 = arith.constant 0 : index
    %c0_14 = arith.constant 0 : index
    %17 = vector.load %arg8[%c0_12, %c0_13, %c0_14] : memref<3x24x8xf32, #tpu.memory_space<vmem>>, vector<3x16x8xf32>
    tpu.vector_store %arg8[%c0_12, %c0_13, %c0_14], %16 {strides = array<i32>} : memref<3x24x8xf32, #tpu.memory_space<vmem>>, vector<3x16x8xf32>,
    %cst_15 = arith.constant 0.000000e+00 : f32
    %18 = vector.broadcast %cst_15 : f32 to vector<3x64xf32>
    %19 = vector.extract_strided_slice %16 {offsets = [0, 0, 0], sizes = [3, 1, 8], strides = [1, 1, 1]} : vector<3x16x8xf32> to vector<3x1x8xf32>
    %20 = vector.shape_cast %19 : vector<3x1x8xf32> to vector<3x8xf32>
    %c0_16 = arith.constant 0 : index
    %c0_17 = arith.constant 0 : index
    %c0_18 = arith.constant 0 : index
    %21 = vector.load %arg6[%c0_16, %c0_17, %c0_18] : memref<16x8x64xf32, #tpu.memory_space<vmem>>, vector<1x8x64xf32>
    %22 = vector.shape_cast %21 : vector<1x8x64xf32> to vector<8x64xf32>
    %cst_19 = arith.constant dense<0.000000e+00> : vector<3x64xf32>
    %23 = tpu.matmul %20, %22, %cst_19 {dimension_numbers = #tpu.dot_dimension_numbers<[1], [0], [0], [1], [0, 0, 1, 1], [], []>} : vector<3x8xf32>, vector<8x64xf32>, vector<3x64xf32> -> vector<3x64xf32>
    %24 = arith.addf %18, %23 : vector<3x64xf32>
    %25 = vector.extract_strided_slice %16 {offsets = [0, 1, 0], sizes = [3, 1, 8], strides = [1, 1, 1]} : vector<3x16x8xf32> to vector<3x1x8xf32>
    %26 = vector.shape_cast %25 : vector<3x1x8xf32> to vector<3x8xf32>
    %c1 = arith.constant 1 : index
    %c0_20 = arith.constant 0 : index
    %c0_21 = arith.constant 0 : index
    %27 = vector.load %arg6[%c1, %c0_20, %c0_21] : memref<16x8x64xf32, #tpu.memory_space<vmem>>, vector<1x8x64xf32>
    %28 = vector.shape_cast %27 : vector<1x8x64xf32> to vector<8x64xf32>
    %cst_22 = arith.constant dense<0.000000e+00> : vector<3x64xf32>
    %29 = tpu.matmul %26, %28, %cst_22 {dimension_numbers = #tpu.dot_dimension_numbers<[1], [0], [0], [1], [0, 0, 1, 1], [], []>} : vector<3x8xf32>, vector<8x64xf32>, vector<3x64xf32> -> vector<3x64xf32>
    %30 = arith.addf %24, %29 : vector<3x64xf32>
    %31 = vector.extract_strided_slice %16 {offsets = [0, 2, 0], sizes = [3, 1, 8], strides = [1, 1, 1]} : vector<3x16x8xf32> to vector<3x1x8xf32>
    %32 = vector.shape_cast %31 : vector<3x1x8xf32> to vector<3x8xf32>
    %c2 = arith.constant 2 : index
    %c0_23 = arith.constant 0 : index
    %c0_24 = arith.constant 0 : index
    %33 = vector.load %arg6[%c2, %c0_23, %c0_24] : memref<16x8x64xf32, #tpu.memory_space<vmem>>, vector<1x8x64xf32>
    %34 = vector.shape_cast %33 : vector<1x8x64xf32> to vector<8x64xf32>
    %cst_25 = arith.constant dense<0.000000e+00> : vector<3x64xf32>
    %35 = tpu.matmul %32, %34, %cst_25 {dimension_numbers = #tpu.dot_dimension_numbers<[1], [0], [0], [1], [0, 0, 1, 1], [], []>} : vector<3x8xf32>, vector<8x64xf32>, vector<3x64xf32> -> vector<3x64xf32>
    %36 = arith.addf %30, %35 : vector<3x64xf32>
    %37 = vector.extract_strided_slice %16 {offsets = [0, 3, 0], sizes = [3, 1, 8], strides = [1, 1, 1]} : vector<3x16x8xf32> to vector<3x1x8xf32>
    %38 = vector.shape_cast %37 : vector<3x1x8xf32> to vector<3x8xf32>
    %c3 = arith.constant 3 : index
    %c0_26 = arith.constant 0 : index
    %c0_27 = arith.constant 0 : index
    %39 = vector.load %arg6[%c3, %c0_26, %c0_27] : memref<16x8x64xf32, #tpu.memory_space<vmem>>, vector<1x8x64xf32>
    %40 = vector.shape_cast %39 : vector<1x8x64xf32> to vector<8x64xf32>
    %cst_28 = arith.constant dense<0.000000e+00> : vector<3x64xf32>
    %41 = tpu.matmul %38, %40, %cst_28 {dimension_numbers = #tpu.dot_dimension_numbers<[1], [0], [0], [1], [0, 0, 1, 1], [], []>} : vector<3x8xf32>, vector<8x64xf32>, vector<3x64xf32> -> vector<3x64xf32>
    %42 = arith.addf %36, %41 : vector<3x64xf32>
    %43 = vector.extract_strided_slice %16 {offsets = [0, 4, 0], sizes = [3, 1, 8], strides = [1, 1, 1]} : vector<3x16x8xf32> to vector<3x1x8xf32>
    %44 = vector.shape_cast %43 : vector<3x1x8xf32> to vector<3x8xf32>
    %c4 = arith.constant 4 : index
    %c0_29 = arith.constant 0 : index
    %c0_30 = arith.constant 0 : index
    %45 = vector.load %arg6[%c4, %c0_29, %c0_30] : memref<16x8x64xf32, #tpu.memory_space<vmem>>, vector<1x8x64xf32>
    %46 = vector.shape_cast %45 : vector<1x8x64xf32> to vector<8x64xf32>
    %cst_31 = arith.constant dense<0.000000e+00> : vector<3x64xf32>
    %47 = tpu.matmul %44, %46, %cst_31 {dimension_numbers = #tpu.dot_dimension_numbers<[1], [0], [0], [1], [0, 0, 1, 1], [], []>} : vector<3x8xf32>, vector<8x64xf32>, vector<3x64xf32> -> vector<3x64xf32>
    %48 = arith.addf %42, %47 : vector<3x64xf32>
    %49 = vector.extract_strided_slice %16 {offsets = [0, 5, 0], sizes = [3, 1, 8], strides = [1, 1, 1]} : vector<3x16x8xf32> to vector<3x1x8xf32>
    %50 = vector.shape_cast %49 : vector<3x1x8xf32> to vector<3x8xf32>
    %c5 = arith.constant 5 : index
    %c0_32 = arith.constant 0 : index
    %c0_33 = arith.constant 0 : index
    %51 = vector.load %arg6[%c5, %c0_32, %c0_33] : memref<16x8x64xf32, #tpu.memory_space<vmem>>, vector<1x8x64xf32>
    %52 = vector.shape_cast %51 : vector<1x8x64xf32> to vector<8x64xf32>
    %cst_34 = arith.constant dense<0.000000e+00> : vector<3x64xf32>
    %53 = tpu.matmul %50, %52, %cst_34 {dimension_numbers = #tpu.dot_dimension_numbers<[1], [0], [0], [1], [0, 0, 1, 1], [], []>} : vector<3x8xf32>, vector<8x64xf32>, vector<3x64xf32> -> vector<3x64xf32>
    %54 = arith.addf %48, %53 : vector<3x64xf32>
    %55 = vector.extract_strided_slice %16 {offsets = [0, 6, 0], sizes = [3, 1, 8], strides = [1, 1, 1]} : vector<3x16x8xf32> to vector<3x1x8xf32>
    %56 = vector.shape_cast %55 : vector<3x1x8xf32> to vector<3x8xf32>
    %c6 = arith.constant 6 : index
    %c0_35 = arith.constant 0 : index
    %c0_36 = arith.constant 0 : index
    %57 = vector.load %arg6[%c6, %c0_35, %c0_36] : memref<16x8x64xf32, #tpu.memory_space<vmem>>, vector<1x8x64xf32>
    %58 = vector.shape_cast %57 : vector<1x8x64xf32> to vector<8x64xf32>
    %cst_37 = arith.constant dense<0.000000e+00> : vector<3x64xf32>
    %59 = tpu.matmul %56, %58, %cst_37 {dimension_numbers = #tpu.dot_dimension_numbers<[1], [0], [0], [1], [0, 0, 1, 1], [], []>} : vector<3x8xf32>, vector<8x64xf32>, vector<3x64xf32> -> vector<3x64xf32>
    %60 = arith.addf %54, %59 : vector<3x64xf32>
    %61 = vector.extract_strided_slice %16 {offsets = [0, 7, 0], sizes = [3, 1, 8], strides = [1, 1, 1]} : vector<3x16x8xf32> to vector<3x1x8xf32>
    %62 = vector.shape_cast %61 : vector<3x1x8xf32> to vector<3x8xf32>
    %c7 = arith.constant 7 : index
    %c0_38 = arith.constant 0 : index
    %c0_39 = arith.constant 0 : index
    %63 = vector.load %arg6[%c7, %c0_38, %c0_39] : memref<16x8x64xf32, #tpu.memory_space<vmem>>, vector<1x8x64xf32>
    %64 = vector.shape_cast %63 : vector<1x8x64xf32> to vector<8x64xf32>
    %cst_40 = arith.constant dense<0.000000e+00> : vector<3x64xf32>
    %65 = tpu.matmul %62, %64, %cst_40 {dimension_numbers = #tpu.dot_dimension_numbers<[1], [0], [0], [1], [0, 0, 1, 1], [], []>} : vector<3x8xf32>, vector<8x64xf32>, vector<3x64xf32> -> vector<3x64xf32>
    %66 = arith.addf %60, %65 : vector<3x64xf32>
    %67 = vector.extract_strided_slice %16 {offsets = [0, 8, 0], sizes = [3, 1, 8], strides = [1, 1, 1]} : vector<3x16x8xf32> to vector<3x1x8xf32>
    %68 = vector.shape_cast %67 : vector<3x1x8xf32> to vector<3x8xf32>
    %c8 = arith.constant 8 : index
    %c0_41 = arith.constant 0 : index
    %c0_42 = arith.constant 0 : index
    %69 = vector.load %arg6[%c8, %c0_41, %c0_42] : memref<16x8x64xf32, #tpu.memory_space<vmem>>, vector<1x8x64xf32>
    %70 = vector.shape_cast %69 : vector<1x8x64xf32> to vector<8x64xf32>
    %cst_43 = arith.constant dense<0.000000e+00> : vector<3x64xf32>
    %71 = tpu.matmul %68, %70, %cst_43 {dimension_numbers = #tpu.dot_dimension_numbers<[1], [0], [0], [1], [0, 0, 1, 1], [], []>} : vector<3x8xf32>, vector<8x64xf32>, vector<3x64xf32> -> vector<3x64xf32>
    %72 = arith.addf %66, %71 : vector<3x64xf32>
    %73 = vector.extract_strided_slice %16 {offsets = [0, 9, 0], sizes = [3, 1, 8], strides = [1, 1, 1]} : vector<3x16x8xf32> to vector<3x1x8xf32>
    %74 = vector.shape_cast %73 : vector<3x1x8xf32> to vector<3x8xf32>
    %c9 = arith.constant 9 : index
    %c0_44 = arith.constant 0 : index
    %c0_45 = arith.constant 0 : index
    %75 = vector.load %arg6[%c9, %c0_44, %c0_45] : memref<16x8x64xf32, #tpu.memory_space<vmem>>, vector<1x8x64xf32>
    %76 = vector.shape_cast %75 : vector<1x8x64xf32> to vector<8x64xf32>
    %cst_46 = arith.constant dense<0.000000e+00> : vector<3x64xf32>
    %77 = tpu.matmul %74, %76, %cst_46 {dimension_numbers = #tpu.dot_dimension_numbers<[1], [0], [0], [1], [0, 0, 1, 1], [], []>} : vector<3x8xf32>, vector<8x64xf32>, vector<3x64xf32> -> vector<3x64xf32>
    %78 = arith.addf %72, %77 : vector<3x64xf32>
    %79 = vector.extract_strided_slice %16 {offsets = [0, 10, 0], sizes = [3, 1, 8], strides = [1, 1, 1]} : vector<3x16x8xf32> to vector<3x1x8xf32>
    %80 = vector.shape_cast %79 : vector<3x1x8xf32> to vector<3x8xf32>
    %c10 = arith.constant 10 : index
    %c0_47 = arith.constant 0 : index
    %c0_48 = arith.constant 0 : index
    %81 = vector.load %arg6[%c10, %c0_47, %c0_48] : memref<16x8x64xf32, #tpu.memory_space<vmem>>, vector<1x8x64xf32>
    %82 = vector.shape_cast %81 : vector<1x8x64xf32> to vector<8x64xf32>
    %cst_49 = arith.constant dense<0.000000e+00> : vector<3x64xf32>
    %83 = tpu.matmul %80, %82, %cst_49 {dimension_numbers = #tpu.dot_dimension_numbers<[1], [0], [0], [1], [0, 0, 1, 1], [], []>} : vector<3x8xf32>, vector<8x64xf32>, vector<3x64xf32> -> vector<3x64xf32>
    %84 = arith.addf %78, %83 : vector<3x64xf32>
    %85 = vector.extract_strided_slice %16 {offsets = [0, 11, 0], sizes = [3, 1, 8], strides = [1, 1, 1]} : vector<3x16x8xf32> to vector<3x1x8xf32>
    %86 = vector.shape_cast %85 : vector<3x1x8xf32> to vector<3x8xf32>
    %c11 = arith.constant 11 : index
    %c0_50 = arith.constant 0 : index
    %c0_51 = arith.constant 0 : index
    %87 = vector.load %arg6[%c11, %c0_50, %c0_51] : memref<16x8x64xf32, #tpu.memory_space<vmem>>, vector<1x8x64xf32>
    %88 = vector.shape_cast %87 : vector<1x8x64xf32> to vector<8x64xf32>
    %cst_52 = arith.constant dense<0.000000e+00> : vector<3x64xf32>
    %89 = tpu.matmul %86, %88, %cst_52 {dimension_numbers = #tpu.dot_dimension_numbers<[1], [0], [0], [1], [0, 0, 1, 1], [], []>} : vector<3x8xf32>, vector<8x64xf32>, vector<3x64xf32> -> vector<3x64xf32>
    %90 = arith.addf %84, %89 : vector<3x64xf32>
    %91 = vector.extract_strided_slice %16 {offsets = [0, 12, 0], sizes = [3, 1, 8], strides = [1, 1, 1]} : vector<3x16x8xf32> to vector<3x1x8xf32>
    %92 = vector.shape_cast %91 : vector<3x1x8xf32> to vector<3x8xf32>
    %c12 = arith.constant 12 : index
    %c0_53 = arith.constant 0 : index
    %c0_54 = arith.constant 0 : index
    %93 = vector.load %arg6[%c12, %c0_53, %c0_54] : memref<16x8x64xf32, #tpu.memory_space<vmem>>, vector<1x8x64xf32>
    %94 = vector.shape_cast %93 : vector<1x8x64xf32> to vector<8x64xf32>
    %cst_55 = arith.constant dense<0.000000e+00> : vector<3x64xf32>
    %95 = tpu.matmul %92, %94, %cst_55 {dimension_numbers = #tpu.dot_dimension_numbers<[1], [0], [0], [1], [0, 0, 1, 1], [], []>} : vector<3x8xf32>, vector<8x64xf32>, vector<3x64xf32> -> vector<3x64xf32>
    %96 = arith.addf %90, %95 : vector<3x64xf32>
    %97 = vector.extract_strided_slice %16 {offsets = [0, 13, 0], sizes = [3, 1, 8], strides = [1, 1, 1]} : vector<3x16x8xf32> to vector<3x1x8xf32>
    %98 = vector.shape_cast %97 : vector<3x1x8xf32> to vector<3x8xf32>
    %c13 = arith.constant 13 : index
    %c0_56 = arith.constant 0 : index
    %c0_57 = arith.constant 0 : index
    %99 = vector.load %arg6[%c13, %c0_56, %c0_57] : memref<16x8x64xf32, #tpu.memory_space<vmem>>, vector<1x8x64xf32>
    %100 = vector.shape_cast %99 : vector<1x8x64xf32> to vector<8x64xf32>
    %cst_58 = arith.constant dense<0.000000e+00> : vector<3x64xf32>
    %101 = tpu.matmul %98, %100, %cst_58 {dimension_numbers = #tpu.dot_dimension_numbers<[1], [0], [0], [1], [0, 0, 1, 1], [], []>} : vector<3x8xf32>, vector<8x64xf32>, vector<3x64xf32> -> vector<3x64xf32>
    %102 = arith.addf %96, %101 : vector<3x64xf32>
    %103 = vector.extract_strided_slice %16 {offsets = [0, 14, 0], sizes = [3, 1, 8], strides = [1, 1, 1]} : vector<3x16x8xf32> to vector<3x1x8xf32>
    %104 = vector.shape_cast %103 : vector<3x1x8xf32> to vector<3x8xf32>
    %c14 = arith.constant 14 : index
    %c0_59 = arith.constant 0 : index
    %c0_60 = arith.constant 0 : index
    %105 = vector.load %arg6[%c14, %c0_59, %c0_60] : memref<16x8x64xf32, #tpu.memory_space<vmem>>, vector<1x8x64xf32>
    %106 = vector.shape_cast %105 : vector<1x8x64xf32> to vector<8x64xf32>
    %cst_61 = arith.constant dense<0.000000e+00> : vector<3x64xf32>
    %107 = tpu.matmul %104, %106, %cst_61 {dimension_numbers = #tpu.dot_dimension_numbers<[1], [0], [0], [1], [0, 0, 1, 1], [], []>} : vector<3x8xf32>, vector<8x64xf32>, vector<3x64xf32> -> vector<3x64xf32>
    %108 = arith.addf %102, %107 : vector<3x64xf32>
    %109 = vector.extract_strided_slice %16 {offsets = [0, 15, 0], sizes = [3, 1, 8], strides = [1, 1, 1]} : vector<3x16x8xf32> to vector<3x1x8xf32>
    %110 = vector.shape_cast %109 : vector<3x1x8xf32> to vector<3x8xf32>
    %c15 = arith.constant 15 : index
    %c0_62 = arith.constant 0 : index
    %c0_63 = arith.constant 0 : index
    %111 = vector.load %arg6[%c15, %c0_62, %c0_63] : memref<16x8x64xf32, #tpu.memory_space<vmem>>, vector<1x8x64xf32>
    %112 = vector.shape_cast %111 : vector<1x8x64xf32> to vector<8x64xf32>
    %cst_64 = arith.constant dense<0.000000e+00> : vector<3x64xf32>
    %113 = tpu.matmul %110, %112, %cst_64 {dimension_numbers = #tpu.dot_dimension_numbers<[1], [0], [0], [1], [0, 0, 1, 1], [], []>} : vector<3x8xf32>, vector<8x64xf32>, vector<3x64xf32> -> vector<3x64xf32>
    %114 = arith.addf %108, %113 : vector<3x64xf32>
    %c0_65 = arith.constant 0 : index
    %c0_66 = arith.constant 0 : index
    %115 = vector.load %arg7[%c0_65, %c0_66] : memref<1x64xf32, #tpu.memory_space<vmem>>, vector<1x64xf32>
    %116 = vector.broadcast %115 : vector<1x64xf32> to vector<3x64xf32>
    %117 = arith.addf %114, %116 : vector<3x64xf32>
    %118 = vector.extract_strided_slice %117 {offsets = [0, 0], sizes = [3, 8], strides = [1, 1]} : vector<3x64xf32> to vector<3x8xf32>
    %119 = vector.extract_strided_slice %118 {offsets = [0, 0], sizes = [1, 8], strides = [1, 1]} : vector<3x8xf32> to vector<1x8xf32>
    %c0_67 = arith.constant 0 : index
    %c16 = arith.constant 16 : index
    %c0_68 = arith.constant 0 : index
    %120 = vector.load %arg8[%c0_67, %c16, %c0_68] : memref<3x24x8xf32, #tpu.memory_space<vmem>>, vector<1x1x8xf32>
    %121 = vector.shape_cast %120 : vector<1x1x8xf32> to vector<1x8xf32>
    %122 = vector.shape_cast %119 : vector<1x8xf32> to vector<1x1x8xf32>
    tpu.vector_store %arg8[%c0_67, %c16, %c0_68], %122 {strides = array<i32>} : memref<3x24x8xf32, #tpu.memory_space<vmem>>, vector<1x1x8xf32>,
    %123 = vector.extract_strided_slice %118 {offsets = [1, 0], sizes = [1, 8], strides = [1, 1]} : vector<3x8xf32> to vector<1x8xf32>
    %c1_69 = arith.constant 1 : index
    %c16_70 = arith.constant 16 : index
    %c0_71 = arith.constant 0 : index
    %124 = vector.load %arg8[%c1_69, %c16_70, %c0_71] : memref<3x24x8xf32, #tpu.memory_space<vmem>>, vector<1x1x8xf32>
    %125 = vector.shape_cast %124 : vector<1x1x8xf32> to vector<1x8xf32>
    %126 = vector.shape_cast %123 : vector<1x8xf32> to vector<1x1x8xf32>
    tpu.vector_store %arg8[%c1_69, %c16_70, %c0_71], %126 {strides = array<i32>} : memref<3x24x8xf32, #tpu.memory_space<vmem>>, vector<1x1x8xf32>,
    %127 = vector.extract_strided_slice %118 {offsets = [2, 0], sizes = [1, 8], strides = [1, 1]} : vector<3x8xf32> to vector<1x8xf32>
    %c2_72 = arith.constant 2 : index
    %c16_73 = arith.constant 16 : index
    %c0_74 = arith.constant 0 : index
    %128 = vector.load %arg8[%c2_72, %c16_73, %c0_74] : memref<3x24x8xf32, #tpu.memory_space<vmem>>, vector<1x1x8xf32>
    %129 = vector.shape_cast %128 : vector<1x1x8xf32> to vector<1x8xf32>
    %130 = vector.shape_cast %127 : vector<1x8xf32> to vector<1x1x8xf32>
    tpu.vector_store %arg8[%c2_72, %c16_73, %c0_74], %130 {strides = array<i32>} : memref<3x24x8xf32, #tpu.memory_space<vmem>>, vector<1x1x8xf32>,
    %131 = vector.extract_strided_slice %117 {offsets = [0, 8], sizes = [3, 8], strides = [1, 1]} : vector<3x64xf32> to vector<3x8xf32>
    %132 = vector.extract_strided_slice %131 {offsets = [0, 0], sizes = [1, 8], strides = [1, 1]} : vector<3x8xf32> to vector<1x8xf32>
    %c0_75 = arith.constant 0 : index
    %c17 = arith.constant 17 : index
    %c0_76 = arith.constant 0 : index
    %133 = vector.load %arg8[%c0_75, %c17, %c0_76] : memref<3x24x8xf32, #tpu.memory_space<vmem>>, vector<1x1x8xf32>
    %134 = vector.shape_cast %133 : vector<1x1x8xf32> to vector<1x8xf32>
    %135 = vector.shape_cast %132 : vector<1x8xf32> to vector<1x1x8xf32>
    tpu.vector_store %arg8[%c0_75, %c17, %c0_76], %135 {strides = array<i32>} : memref<3x24x8xf32, #tpu.memory_space<vmem>>, vector<1x1x8xf32>,
    %136 = vector.extract_strided_slice %131 {offsets = [1, 0], sizes = [1, 8], strides = [1, 1]} : vector<3x8xf32> to vector<1x8xf32>
    %c1_77 = arith.constant 1 : index
    %c17_78 = arith.constant 17 : index
    %c0_79 = arith.constant 0 : index
    %137 = vector.load %arg8[%c1_77, %c17_78, %c0_79] : memref<3x24x8xf32, #tpu.memory_space<vmem>>, vector<1x1x8xf32>
    %138 = vector.shape_cast %137 : vector<1x1x8xf32> to vector<1x8xf32>
    %139 = vector.shape_cast %136 : vector<1x8xf32> to vector<1x1x8xf32>
    tpu.vector_store %arg8[%c1_77, %c17_78, %c0_79], %139 {strides = array<i32>} : memref<3x24x8xf32, #tpu.memory_space<vmem>>, vector<1x1x8xf32>,
    %140 = vector.extract_strided_slice %131 {offsets = [2, 0], sizes = [1, 8], strides = [1, 1]} : vector<3x8xf32> to vector<1x8xf32>
    %c2_80 = arith.constant 2 : index
    %c17_81 = arith.constant 17 : index
    %c0_82 = arith.constant 0 : index
    %141 = vector.load %arg8[%c2_80, %c17_81, %c0_82] : memref<3x24x8xf32, #tpu.memory_space<vmem>>, vector<1x1x8xf32>
    %142 = vector.shape_cast %141 : vector<1x1x8xf32> to vector<1x8xf32>
    %143 = vector.shape_cast %140 : vector<1x8xf32> to vector<1x1x8xf32>
    tpu.vector_store %arg8[%c2_80, %c17_81, %c0_82], %143 {strides = array<i32>} : memref<3x24x8xf32, #tpu.memory_space<vmem>>, vector<1x1x8xf32>,
    %144 = vector.extract_strided_slice %117 {offsets = [0, 16], sizes = [3, 8], strides = [1, 1]} : vector<3x64xf32> to vector<3x8xf32>
    %145 = vector.extract_strided_slice %144 {offsets = [0, 0], sizes = [1, 8], strides = [1, 1]} : vector<3x8xf32> to vector<1x8xf32>
    %c0_83 = arith.constant 0 : index
    %c18 = arith.constant 18 : index
    %c0_84 = arith.constant 0 : index
    %146 = vector.load %arg8[%c0_83, %c18, %c0_84] : memref<3x24x8xf32, #tpu.memory_space<vmem>>, vector<1x1x8xf32>
    %147 = vector.shape_cast %146 : vector<1x1x8xf32> to vector<1x8xf32>
    %148 = vector.shape_cast %145 : vector<1x8xf32> to vector<1x1x8xf32>
    tpu.vector_store %arg8[%c0_83, %c18, %c0_84], %148 {strides = array<i32>} : memref<3x24x8xf32, #tpu.memory_space<vmem>>, vector<1x1x8xf32>,
    %149 = vector.extract_strided_slice %144 {offsets = [1, 0], sizes = [1, 8], strides = [1, 1]} : vector<3x8xf32> to vector<1x8xf32>
    %c1_85 = arith.constant 1 : index
    %c18_86 = arith.constant 18 : index
    %c0_87 = arith.constant 0 : index
    %150 = vector.load %arg8[%c1_85, %c18_86, %c0_87] : memref<3x24x8xf32, #tpu.memory_space<vmem>>, vector<1x1x8xf32>
    %151 = vector.shape_cast %150 : vector<1x1x8xf32> to vector<1x8xf32>
    %152 = vector.shape_cast %149 : vector<1x8xf32> to vector<1x1x8xf32>
    tpu.vector_store %arg8[%c1_85, %c18_86, %c0_87], %152 {strides = array<i32>} : memref<3x24x8xf32, #tpu.memory_space<vmem>>, vector<1x1x8xf32>,
    %153 = vector.extract_strided_slice %144 {offsets = [2, 0], sizes = [1, 8], strides = [1, 1]} : vector<3x8xf32> to vector<1x8xf32>
    %c2_88 = arith.constant 2 : index
    %c18_89 = arith.constant 18 : index
    %c0_90 = arith.constant 0 : index
    %154 = vector.load %arg8[%c2_88, %c18_89, %c0_90] : memref<3x24x8xf32, #tpu.memory_space<vmem>>, vector<1x1x8xf32>
    %155 = vector.shape_cast %154 : vector<1x1x8xf32> to vector<1x8xf32>
    %156 = vector.shape_cast %153 : vector<1x8xf32> to vector<1x1x8xf32>
    tpu.vector_store %arg8[%c2_88, %c18_89, %c0_90], %156 {strides = array<i32>} : memref<3x24x8xf32, #tpu.memory_space<vmem>>, vector<1x1x8xf32>,
    %157 = vector.extract_strided_slice %117 {offsets = [0, 24], sizes = [3, 8], strides = [1, 1]} : vector<3x64xf32> to vector<3x8xf32>
    %158 = vector.extract_strided_slice %157 {offsets = [0, 0], sizes = [1, 8], strides = [1, 1]} : vector<3x8xf32> to vector<1x8xf32>
    %c0_91 = arith.constant 0 : index
    %c19 = arith.constant 19 : index
    %c0_92 = arith.constant 0 : index
    %159 = vector.load %arg8[%c0_91, %c19, %c0_92] : memref<3x24x8xf32, #tpu.memory_space<vmem>>, vector<1x1x8xf32>
    %160 = vector.shape_cast %159 : vector<1x1x8xf32> to vector<1x8xf32>
    %161 = vector.shape_cast %158 : vector<1x8xf32> to vector<1x1x8xf32>
    tpu.vector_store %arg8[%c0_91, %c19, %c0_92], %161 {strides = array<i32>} : memref<3x24x8xf32, #tpu.memory_space<vmem>>, vector<1x1x8xf32>,
    %162 = vector.extract_strided_slice %157 {offsets = [1, 0], sizes = [1, 8], strides = [1, 1]} : vector<3x8xf32> to vector<1x8xf32>
    %c1_93 = arith.constant 1 : index
    %c19_94 = arith.constant 19 : index
    %c0_95 = arith.constant 0 : index
    %163 = vector.load %arg8[%c1_93, %c19_94, %c0_95] : memref<3x24x8xf32, #tpu.memory_space<vmem>>, vector<1x1x8xf32>
    %164 = vector.shape_cast %163 : vector<1x1x8xf32> to vector<1x8xf32>
    %165 = vector.shape_cast %162 : vector<1x8xf32> to vector<1x1x8xf32>
    tpu.vector_store %arg8[%c1_93, %c19_94, %c0_95], %165 {strides = array<i32>} : memref<3x24x8xf32, #tpu.memory_space<vmem>>, vector<1x1x8xf32>,
    %166 = vector.extract_strided_slice %157 {offsets = [2, 0], sizes = [1, 8], strides = [1, 1]} : vector<3x8xf32> to vector<1x8xf32>
    %c2_96 = arith.constant 2 : index
    %c19_97 = arith.constant 19 : index
    %c0_98 = arith.constant 0 : index
    %167 = vector.load %arg8[%c2_96, %c19_97, %c0_98] : memref<3x24x8xf32, #tpu.memory_space<vmem>>, vector<1x1x8xf32>
    %168 = vector.shape_cast %167 : vector<1x1x8xf32> to vector<1x8xf32>
    %169 = vector.shape_cast %166 : vector<1x8xf32> to vector<1x1x8xf32>
    tpu.vector_store %arg8[%c2_96, %c19_97, %c0_98], %169 {strides = array<i32>} : memref<3x24x8xf32, #tpu.memory_space<vmem>>, vector<1x1x8xf32>,
    %170 = vector.extract_strided_slice %117 {offsets = [0, 32], sizes = [3, 8], strides = [1, 1]} : vector<3x64xf32> to vector<3x8xf32>
    %171 = vector.extract_strided_slice %170 {offsets = [0, 0], sizes = [1, 8], strides = [1, 1]} : vector<3x8xf32> to vector<1x8xf32>
    %c0_99 = arith.constant 0 : index
    %c20 = arith.constant 20 : index
    %c0_100 = arith.constant 0 : index
    %172 = vector.load %arg8[%c0_99, %c20, %c0_100] : memref<3x24x8xf32, #tpu.memory_space<vmem>>, vector<1x1x8xf32>
    %173 = vector.shape_cast %172 : vector<1x1x8xf32> to vector<1x8xf32>
    %174 = vector.shape_cast %171 : vector<1x8xf32> to vector<1x1x8xf32>
    tpu.vector_store %arg8[%c0_99, %c20, %c0_100], %174 {strides = array<i32>} : memref<3x24x8xf32, #tpu.memory_space<vmem>>, vector<1x1x8xf32>,
    %175 = vector.extract_strided_slice %170 {offsets = [1, 0], sizes = [1, 8], strides = [1, 1]} : vector<3x8xf32> to vector<1x8xf32>
    %c1_101 = arith.constant 1 : index
    %c20_102 = arith.constant 20 : index
    %c0_103 = arith.constant 0 : index
    %176 = vector.load %arg8[%c1_101, %c20_102, %c0_103] : memref<3x24x8xf32, #tpu.memory_space<vmem>>, vector<1x1x8xf32>
    %177 = vector.shape_cast %176 : vector<1x1x8xf32> to vector<1x8xf32>
    %178 = vector.shape_cast %175 : vector<1x8xf32> to vector<1x1x8xf32>
    tpu.vector_store %arg8[%c1_101, %c20_102, %c0_103], %178 {strides = array<i32>} : memref<3x24x8xf32, #tpu.memory_space<vmem>>, vector<1x1x8xf32>,
    %179 = vector.extract_strided_slice %170 {offsets = [2, 0], sizes = [1, 8], strides = [1, 1]} : vector<3x8xf32> to vector<1x8xf32>
    %c2_104 = arith.constant 2 : index
    %c20_105 = arith.constant 20 : index
    %c0_106 = arith.constant 0 : index
    %180 = vector.load %arg8[%c2_104, %c20_105, %c0_106] : memref<3x24x8xf32, #tpu.memory_space<vmem>>, vector<1x1x8xf32>
    %181 = vector.shape_cast %180 : vector<1x1x8xf32> to vector<1x8xf32>
    %182 = vector.shape_cast %179 : vector<1x8xf32> to vector<1x1x8xf32>
    tpu.vector_store %arg8[%c2_104, %c20_105, %c0_106], %182 {strides = array<i32>} : memref<3x24x8xf32, #tpu.memory_space<vmem>>, vector<1x1x8xf32>,
    %183 = vector.extract_strided_slice %117 {offsets = [0, 40], sizes = [3, 8], strides = [1, 1]} : vector<3x64xf32> to vector<3x8xf32>
    %184 = vector.extract_strided_slice %183 {offsets = [0, 0], sizes = [1, 8], strides = [1, 1]} : vector<3x8xf32> to vector<1x8xf32>
    %c0_107 = arith.constant 0 : index
    %c21 = arith.constant 21 : index
    %c0_108 = arith.constant 0 : index
    %185 = vector.load %arg8[%c0_107, %c21, %c0_108] : memref<3x24x8xf32, #tpu.memory_space<vmem>>, vector<1x1x8xf32>
    %186 = vector.shape_cast %185 : vector<1x1x8xf32> to vector<1x8xf32>
    %187 = vector.shape_cast %184 : vector<1x8xf32> to vector<1x1x8xf32>
    tpu.vector_store %arg8[%c0_107, %c21, %c0_108], %187 {strides = array<i32>} : memref<3x24x8xf32, #tpu.memory_space<vmem>>, vector<1x1x8xf32>,
    %188 = vector.extract_strided_slice %183 {offsets = [1, 0], sizes = [1, 8], strides = [1, 1]} : vector<3x8xf32> to vector<1x8xf32>
    %c1_109 = arith.constant 1 : index
    %c21_110 = arith.constant 21 : index
    %c0_111 = arith.constant 0 : index
    %189 = vector.load %arg8[%c1_109, %c21_110, %c0_111] : memref<3x24x8xf32, #tpu.memory_space<vmem>>, vector<1x1x8xf32>
    %190 = vector.shape_cast %189 : vector<1x1x8xf32> to vector<1x8xf32>
    %191 = vector.shape_cast %188 : vector<1x8xf32> to vector<1x1x8xf32>
    tpu.vector_store %arg8[%c1_109, %c21_110, %c0_111], %191 {strides = array<i32>} : memref<3x24x8xf32, #tpu.memory_space<vmem>>, vector<1x1x8xf32>,
    %192 = vector.extract_strided_slice %183 {offsets = [2, 0], sizes = [1, 8], strides = [1, 1]} : vector<3x8xf32> to vector<1x8xf32>
    %c2_112 = arith.constant 2 : index
    %c21_113 = arith.constant 21 : index
    %c0_114 = arith.constant 0 : index
    %193 = vector.load %arg8[%c2_112, %c21_113, %c0_114] : memref<3x24x8xf32, #tpu.memory_space<vmem>>, vector<1x1x8xf32>
    %194 = vector.shape_cast %193 : vector<1x1x8xf32> to vector<1x8xf32>
    %195 = vector.shape_cast %192 : vector<1x8xf32> to vector<1x1x8xf32>
    tpu.vector_store %arg8[%c2_112, %c21_113, %c0_114], %195 {strides = array<i32>} : memref<3x24x8xf32, #tpu.memory_space<vmem>>, vector<1x1x8xf32>,
    %196 = vector.extract_strided_slice %117 {offsets = [0, 48], sizes = [3, 8], strides = [1, 1]} : vector<3x64xf32> to vector<3x8xf32>
    %197 = vector.extract_strided_slice %196 {offsets = [0, 0], sizes = [1, 8], strides = [1, 1]} : vector<3x8xf32> to vector<1x8xf32>
    %c0_115 = arith.constant 0 : index
    %c22 = arith.constant 22 : index
    %c0_116 = arith.constant 0 : index
    %198 = vector.load %arg8[%c0_115, %c22, %c0_116] : memref<3x24x8xf32, #tpu.memory_space<vmem>>, vector<1x1x8xf32>
    %199 = vector.shape_cast %198 : vector<1x1x8xf32> to vector<1x8xf32>
    %200 = vector.shape_cast %197 : vector<1x8xf32> to vector<1x1x8xf32>
    tpu.vector_store %arg8[%c0_115, %c22, %c0_116], %200 {strides = array<i32>} : memref<3x24x8xf32, #tpu.memory_space<vmem>>, vector<1x1x8xf32>,
    %201 = vector.extract_strided_slice %196 {offsets = [1, 0], sizes = [1, 8], strides = [1, 1]} : vector<3x8xf32> to vector<1x8xf32>
    %c1_117 = arith.constant 1 : index
    %c22_118 = arith.constant 22 : index
    %c0_119 = arith.constant 0 : index
    %202 = vector.load %arg8[%c1_117, %c22_118, %c0_119] : memref<3x24x8xf32, #tpu.memory_space<vmem>>, vector<1x1x8xf32>
    %203 = vector.shape_cast %202 : vector<1x1x8xf32> to vector<1x8xf32>
    %204 = vector.shape_cast %201 : vector<1x8xf32> to vector<1x1x8xf32>
    tpu.vector_store %arg8[%c1_117, %c22_118, %c0_119], %204 {strides = array<i32>} : memref<3x24x8xf32, #tpu.memory_space<vmem>>, vector<1x1x8xf32>,
    %205 = vector.extract_strided_slice %196 {offsets = [2, 0], sizes = [1, 8], strides = [1, 1]} : vector<3x8xf32> to vector<1x8xf32>
    %c2_120 = arith.constant 2 : index
    %c22_121 = arith.constant 22 : index
    %c0_122 = arith.constant 0 : index
    %206 = vector.load %arg8[%c2_120, %c22_121, %c0_122] : memref<3x24x8xf32, #tpu.memory_space<vmem>>, vector<1x1x8xf32>
    %207 = vector.shape_cast %206 : vector<1x1x8xf32> to vector<1x8xf32>
    %208 = vector.shape_cast %205 : vector<1x8xf32> to vector<1x1x8xf32>
    tpu.vector_store %arg8[%c2_120, %c22_121, %c0_122], %208 {strides = array<i32>} : memref<3x24x8xf32, #tpu.memory_space<vmem>>, vector<1x1x8xf32>,
    %209 = vector.extract_strided_slice %117 {offsets = [0, 56], sizes = [3, 8], strides = [1, 1]} : vector<3x64xf32> to vector<3x8xf32>
    %210 = vector.extract_strided_slice %209 {offsets = [0, 0], sizes = [1, 8], strides = [1, 1]} : vector<3x8xf32> to vector<1x8xf32>
    %c0_123 = arith.constant 0 : index
    %c23 = arith.constant 23 : index
    %c0_124 = arith.constant 0 : index
    %211 = vector.load %arg8[%c0_123, %c23, %c0_124] : memref<3x24x8xf32, #tpu.memory_space<vmem>>, vector<1x1x8xf32>
    %212 = vector.shape_cast %211 : vector<1x1x8xf32> to vector<1x8xf32>
    %213 = vector.shape_cast %210 : vector<1x8xf32> to vector<1x1x8xf32>
    tpu.vector_store %arg8[%c0_123, %c23, %c0_124], %213 {strides = array<i32>} : memref<3x24x8xf32, #tpu.memory_space<vmem>>, vector<1x1x8xf32>,
    %214 = vector.extract_strided_slice %209 {offsets = [1, 0], sizes = [1, 8], strides = [1, 1]} : vector<3x8xf32> to vector<1x8xf32>
    %c1_125 = arith.constant 1 : index
    %c23_126 = arith.constant 23 : index
    %c0_127 = arith.constant 0 : index
    %215 = vector.load %arg8[%c1_125, %c23_126, %c0_127] : memref<3x24x8xf32, #tpu.memory_space<vmem>>, vector<1x1x8xf32>
    %216 = vector.shape_cast %215 : vector<1x1x8xf32> to vector<1x8xf32>
    %217 = vector.shape_cast %214 : vector<1x8xf32> to vector<1x1x8xf32>
    tpu.vector_store %arg8[%c1_125, %c23_126, %c0_127], %217 {strides = array<i32>} : memref<3x24x8xf32, #tpu.memory_space<vmem>>, vector<1x1x8xf32>,
    %218 = vector.extract_strided_slice %209 {offsets = [2, 0], sizes = [1, 8], strides = [1, 1]} : vector<3x8xf32> to vector<1x8xf32>
    %c2_128 = arith.constant 2 : index
    %c23_129 = arith.constant 23 : index
    %c0_130 = arith.constant 0 : index
    %219 = vector.load %arg8[%c2_128, %c23_129, %c0_130] : memref<3x24x8xf32, #tpu.memory_space<vmem>>, vector<1x1x8xf32>
    %220 = vector.shape_cast %219 : vector<1x1x8xf32> to vector<1x8xf32>
    %221 = vector.shape_cast %218 : vector<1x8xf32> to vector<1x1x8xf32>
    tpu.vector_store %arg8[%c2_128, %c23_129, %c0_130], %221 {strides = array<i32>} : memref<3x24x8xf32, #tpu.memory_space<vmem>>, vector<1x1x8xf32>,
    return
  }
  func.func @transform_0(%arg0: i32) -> (i32, i32, i32) {
    %c0_i32 = arith.constant 0 : i32
    %c0_i32_0 = arith.constant 0 : i32
    %c0_i32_1 = arith.constant 0 : i32
    %c0_i32_2 = arith.constant 0 : i32
    return %c0_i32, %c0_i32_0, %c0_i32_1 : i32, i32, i32
  }
  func.func @transform_1(%arg0: i32) -> (i32, i32) {
    %c0_i32 = arith.constant 0 : i32
    %c0_i32_0 = arith.constant 0 : i32
    %c0_i32_1 = arith.constant 0 : i32
    return %c0_i32, %c0_i32_0 : i32, i32
  }
  func.func @transform_2(%arg0: i32) -> (i32, i32) {
    %c0_i32 = arith.constant 0 : i32
    %c0_i32_0 = arith.constant 0 : i32
    %c0_i32_1 = arith.constant 0 : i32
    return %c0_i32, %c0_i32_0 : i32, i32
  }
  func.func @transform_3(%arg0: i32) -> (i32, i32) {
    %c0_i32 = arith.constant 0 : i32
    %c0_i32_0 = arith.constant 0 : i32
    %c0_i32_1 = arith.constant 0 : i32
    return %c0_i32, %c0_i32_0 : i32, i32
  }
  func.func @transform_4(%arg0: i32) -> (i32, i32) {
    %c0_i32 = arith.constant 0 : i32
    %c0_i32_0 = arith.constant 0 : i32
    %c0_i32_1 = arith.constant 0 : i32
    return %c0_i32, %c0_i32_0 : i32, i32
  }
  func.func @transform_5(%arg0: i32) -> (i32, i32, i32) {
    %c0_i32 = arith.constant 0 : i32
    %c0_i32_0 = arith.constant 0 : i32
    %c0_i32_1 = arith.constant 0 : i32
    %c0_i32_2 = arith.constant 0 : i32
    return %c0_i32, %c0_i32_0, %c0_i32_1 : i32, i32, i32
  }
  func.func @transform_6(%arg0: i32) -> (i32, i32) {
    %c0_i32 = arith.constant 0 : i32
    %c0_i32_0 = arith.constant 0 : i32
    %c0_i32_1 = arith.constant 0 : i32
    return %c0_i32, %c0_i32_0 : i32, i32
  }
  func.func @transform_7(%arg0: i32) -> (i32, i32, i32) {
    %c0_i32 = arith.constant 0 : i32
    %c0_i32_0 = arith.constant 0 : i32
    %c0_i32_1 = arith.constant 0 : i32
    %c0_i32_2 = arith.constant 0 : i32
    return %c0_i32, %c0_i32_0, %c0_i32_1 : i32, i32, i32
  }
}

</mosaic_0001>

<llo_original>
// kernel: tpu_custom_call.1
$region0: #{tpu_custom_call.1}
  #allocation0 [shape = 'u32[]', space=smem, size = 0x4, offset = 0x4, fixed_abs, tag = 'smem constant byte address 0x4 - core index']
  #allocation1 [shape = 'u32[144,128]{1,0:T(1,128)}', space=vmem, size = 0x12000, scoped, tag = 'internal scratch']
  %s0 = inlined_call_operand.vmem [shape: f32[3,24,8], index: 0, kind: input, shape index: {}]
  %s1 = inlined_call_operand.vmem [shape: f32[8,32], index: 1, kind: input, shape index: {}]
  %s2 = inlined_call_operand.vmem [shape: f32[1,32], index: 2, kind: input, shape index: {}]
  %s3 = inlined_call_operand.vmem [shape: f32[32,8], index: 3, kind: input, shape index: {}]
  %s4 = inlined_call_operand.vmem [shape: f32[1,8], index: 4, kind: input, shape index: {}]
  %s5 = inlined_call_operand.vmem [shape: f32[16,8,64], index: 5, kind: input, shape index: {}]
  %s6 = inlined_call_operand.vmem [shape: f32[1,64], index: 6, kind: input, shape index: {}]
  %s7 = inlined_call_operand.vmem [shape: f32[3,24,8], index: 7, kind: output, shape index: {}]
  %s8 = sld [smem:[#allocation0]]
  $region38: #{tpu_custom_call.1} parent=0
    _
  %s10 = ssub.s32 1, %s8
  %s11 = scalar_select 0, %s10, %s8
  // Predicated region
  $region2: #{tpu_custom_call.1} parent=0 // pred_check
    _
  $region3: #{tpu_custom_call.1} parent=0 // pred_check_branch
    %13 = sbr.rel (0) target = $region5
  $region4: #{tpu_custom_call.1} parent=0 // pred_region
    _
  $region5: #{tpu_custom_call.1} parent=0 // pred_fallthru
    _
  // Predicated region
  $region6: #{tpu_custom_call.1} parent=0 // pred_check
    _
  $region7: #{tpu_custom_call.1} parent=0 // pred_check_branch
    %15 = sbr.rel (0) target = $region9
  $region8: #{tpu_custom_call.1} parent=0 // pred_region
    _
  $region9: #{tpu_custom_call.1} parent=0 // pred_fallthru
    _
  // Predicated region
  $region10: #{tpu_custom_call.1} parent=0 // pred_check
    _
  $region11: #{tpu_custom_call.1} parent=0 // pred_check_branch
    %17 = sbr.rel (0) target = $region13
  $region12: #{tpu_custom_call.1} parent=0 // pred_region
    _
  $region13: #{tpu_custom_call.1} parent=0 // pred_fallthru
    _
  // Predicated region
  $region14: #{tpu_custom_call.1} parent=0 // pred_check
    _
  $region15: #{tpu_custom_call.1} parent=0 // pred_check_branch
    %19 = sbr.rel (0) target = $region17
  $region16: #{tpu_custom_call.1} parent=0 // pred_region
    _
  $region17: #{tpu_custom_call.1} parent=0 // pred_fallthru
    _
  // Predicated region
  $region18: #{tpu_custom_call.1} parent=0 // pred_check
    _
  $region19: #{tpu_custom_call.1} parent=0 // pred_check_branch
    %21 = sbr.rel (0) target = $region21
  $region20: #{tpu_custom_call.1} parent=0 // pred_region
    _
  $region21: #{tpu_custom_call.1} parent=0 // pred_fallthru
    _
  // Predicated region
  $region22: #{tpu_custom_call.1} parent=0 // pred_check
    _
  $region23: #{tpu_custom_call.1} parent=0 // pred_check_branch
    %23 = sbr.rel (0) target = $region25
  $region24: #{tpu_custom_call.1} parent=0 // pred_region
    _
  $region25: #{tpu_custom_call.1} parent=0 // pred_fallthru
    _
  // Predicated region
  $region26: #{tpu_custom_call.1} parent=0 // pred_check
    _
  $region27: #{tpu_custom_call.1} parent=0 // pred_check_branch
    %25 = sbr.rel (0) target = $region29
  $region28: #{tpu_custom_call.1} parent=0 // pred_region
    _
  $region29: #{tpu_custom_call.1} parent=0 // pred_fallthru
    _
  %v26 = vld [vmem:[%s0] sm:$0xff]
  %v27 = vld [vmem:[%s0 + $0x8] sm:$0xff]
  %v28 = vld [vmem:[%s0 + $0x10] sm:$0xff]
  %v29 = vld [vmem:[%s0 + $0x18] sm:$0xff]
  %v30 = vld [vmem:[%s0 + $0x20] sm:$0xff]
  %v31 = vld [vmem:[%s0 + $0x28] sm:$0xff]
  %v32 = vld [vmem:[%s0 + $0x30] sm:$0xff]
  %v33 = vld [vmem:[%s0 + $0x38] sm:$0xff]
  %v34 = vld [vmem:[%s0 + $0x40] sm:$0xff]
  %vm35 = vcmask 64512
  %v37 = vsel %vm35, %v26, 0
  %v40 = vsel %vm35, %v27, 0
  %v43 = vsel %vm35, %v28, 0
  %45 = vmatprep.subr.mxu0 0.0
  %46 = vmatpush1.xpose.msra.mxu0 %v43
  %47 = vmatprep.subr.mxu0 0.0
  %48 = vmatpush1.xpose.msra.mxu0 0.0
  %49 = vmatprep.subr.mxu0 0.0
  %50 = vmatpush1.xpose.msra.mxu0 0.0
  %51 = vmatprep.subr.mxu0 0.0
  %52 = vmatpush1.xpose.msra.mxu0 0.0
  %53 = vmatprep.subr.mxu0 0.0
  %54 = vmatpush1.xpose.msra.mxu0 0.0
  %55 = vmatprep.subr.mxu0 0.0
  %56 = vmatpush1.xpose.msra.mxu0 0.0
  %57 = vmatprep.subr.mxu0 0.0
  %58 = vmatpush1.xpose.msra.mxu0 0.0
  %59 = vmatprep.subr.mxu0 0.0
  %60 = vmatpush1.xpose.msra.mxu0 0.0
  %61 = vmatprep.subr.mxu0 0.0
  %62 = vmatpush1.xpose.msra.mxu0 0.0
  %63 = vmatprep.subr.mxu0 0.0
  %64 = vmatpush1.xpose.msra.mxu0 0.0
  %65 = vmatprep.subr.mxu0 0.0
  %66 = vmatpush1.xpose.msra.mxu0 0.0
  %67 = vmatprep.subr.mxu0 0.0
  %68 = vmatpush1.xpose.msra.mxu0 0.0
  %69 = vmatprep.subr.mxu0 0.0
  %70 = vmatpush1.xpose.msra.mxu0 0.0
  %71 = vmatprep.subr.mxu0 0.0
  %72 = vmatpush1.xpose.msra.mxu0 0.0
  %73 = vmatprep.subr.mxu0 0.0
  %74 = vmatpush1.xpose.msra.mxu0 0.0
  %75 = vmatprep.subr.mxu0 0.0
  %76 = vmatpush1.xpose.msra.mxu0 0.0
  %77 = vmatprep.subr.mxu0 0.0
  %78 = vmatpush1.xpose.msra.mxu0 0.0
  %79 = vmatprep.subr.mxu0 0.0
  %80 = vmatpush1.xpose.msra.mxu0 0.0
  %81 = vmatprep.subr.mxu0 0.0
  %82 = vmatpush1.xpose.msra.mxu0 0.0
  %83 = vmatprep.subr.mxu0 0.0
  %84 = vmatpush1.xpose.msra.mxu0 0.0
  %85 = vmatprep.subr.mxu0 0.0
  %86 = vmatpush1.xpose.msra.mxu0 0.0
  %87 = vmatprep.subr.mxu0 0.0
  %88 = vmatpush1.xpose.msra.mxu0 0.0
  %89 = vmatprep.subr.mxu0 0.0
  %90 = vmatpush1.xpose.msra.mxu0 0.0
  %91 = vmatprep.subr.mxu0 0.0
  %92 = vmatpush1.xpose.msra.mxu0 0.0
  %93 = vmatprep.subr.mxu0 0.0
  %94 = vmatpush1.xpose.msra.mxu0 0.0
  %95 = vmatprep.subr.mxu0 0.0
  %96 = vmatpush1.xpose.msra.mxu0 0.0
  %97 = vmatprep.subr.mxu0 0.0
  %98 = vmatpush1.xpose.msra.mxu0 0.0
  %99 = vmatprep.subr.mxu0 0.0
  %100 = vmatpush1.xpose.msra.mxu0 0.0
  %101 = vmatprep.subr.mxu0 0.0
  %102 = vmatpush1.xpose.msra.mxu0 0.0
  %103 = vmatprep.subr.mxu0 0.0
  %104 = vmatpush1.xpose.msra.mxu0 0.0
  %105 = vmatprep.subr.mxu0 0.0
  %106 = vmatpush1.xpose.msra.mxu0 0.0
  %107 = vmatprep.subr.mxu0 0.0
  %108 = vmatpush1.xpose.msra.mxu0 0.0
  %109 = vmatprep.mubr.f32.mxu0 0.0
  %110 = vmatmul.mubr.f32.gmra.mrb[0].mxu0 %v37
  %v111 = vpop.f32.mrb[0].mxu0
  %v112 = vadd.f32 0.0, %v111
  %v113 = vpop.f32.mrb[0].mxu0
  %114 = vmatprep.mubr.f32.mxu0 0.0
  %115 = vmatmul.mubr.f32.gmra.mrb[0].mxu0 %v40
  %v116 = vpop.f32.mrb[0].mxu0
  %v117 = vadd.f32 0.0, %v116
  %v118 = vpop.f32.mrb[0].mxu0
  %119 = vdwg.mxu0
  %v121 = vsel %vm35, %v29, 0
  %v124 = vsel %vm35, %v30, 0
  %v127 = vsel %vm35, %v31, 0
  %129 = vmatprep.subr.mxu0 0.0
  %130 = vmatpush1.xpose.msra.mxu0 %v127
  %131 = vmatprep.subr.mxu0 0.0
  %132 = vmatpush1.xpose.msra.mxu0 0.0
  %133 = vmatprep.subr.mxu0 0.0
  %134 = vmatpush1.xpose.msra.mxu0 0.0
  %135 = vmatprep.subr.mxu0 0.0
  %136 = vmatpush1.xpose.msra.mxu0 0.0
  %137 = vmatprep.subr.mxu0 0.0
  %138 = vmatpush1.xpose.msra.mxu0 0.0
  %139 = vmatprep.subr.mxu0 0.0
  %140 = vmatpush1.xpose.msra.mxu0 0.0
  %141 = vmatprep.subr.mxu0 0.0
  %142 = vmatpush1.xpose.msra.mxu0 0.0
  %143 = vmatprep.subr.mxu0 0.0
  %144 = vmatpush1.xpose.msra.mxu0 0.0
  %145 = vmatprep.subr.mxu0 0.0
  %146 = vmatpush1.xpose.msra.mxu0 0.0
  %147 = vmatprep.subr.mxu0 0.0
  %148 = vmatpush1.xpose.msra.mxu0 0.0
  %149 = vmatprep.subr.mxu0 0.0
  %150 = vmatpush1.xpose.msra.mxu0 0.0
  %151 = vmatprep.subr.mxu0 0.0
  %152 = vmatpush1.xpose.msra.mxu0 0.0
  %153 = vmatprep.subr.mxu0 0.0
  %154 = vmatpush1.xpose.msra.mxu0 0.0
  %155 = vmatprep.subr.mxu0 0.0
  %156 = vmatpush1.xpose.msra.mxu0 0.0
  %157 = vmatprep.subr.mxu0 0.0
  %158 = vmatpush1.xpose.msra.mxu0 0.0
  %159 = vmatprep.subr.mxu0 0.0
  %160 = vmatpush1.xpose.msra.mxu0 0.0
  %161 = vmatprep.subr.mxu0 0.0
  %162 = vmatpush1.xpose.msra.mxu0 0.0
  %163 = vmatprep.subr.mxu0 0.0
  %164 = vmatpush1.xpose.msra.mxu0 0.0
  %165 = vmatprep.subr.mxu0 0.0
  %166 = vmatpush1.xpose.msra.mxu0 0.0
  %167 = vmatprep.subr.mxu0 0.0
  %168 = vmatpush1.xpose.msra.mxu0 0.0
  %169 = vmatprep.subr.mxu0 0.0
  %170 = vmatpush1.xpose.msra.mxu0 0.0
  %171 = vmatprep.subr.mxu0 0.0
  %172 = vmatpush1.xpose.msra.mxu0 0.0
  %173 = vmatprep.subr.mxu0 0.0
  %174 = vmatpush1.xpose.msra.mxu0 0.0
  %175 = vmatprep.subr.mxu0 0.0
  %176 = vmatpush1.xpose.msra.mxu0 0.0
  %177 = vmatprep.subr.mxu0 0.0
  %178 = vmatpush1.xpose.msra.mxu0 0.0
  %179 = vmatprep.subr.mxu0 0.0
  %180 = vmatpush1.xpose.msra.mxu0 0.0
  %181 = vmatprep.subr.mxu0 0.0
  %182 = vmatpush1.xpose.msra.mxu0 0.0
  %183 = vmatprep.subr.mxu0 0.0
  %184 = vmatpush1.xpose.msra.mxu0 0.0
  %185 = vmatprep.subr.mxu0 0.0
  %186 = vmatpush1.xpose.msra.mxu0 0.0
  %187 = vmatprep.subr.mxu0 0.0
  %188 = vmatpush1.xpose.msra.mxu0 0.0
  %189 = vmatprep.subr.mxu0 0.0
  %190 = vmatpush1.xpose.msra.mxu0 0.0
  %191 = vmatprep.subr.mxu0 0.0
  %192 = vmatpush1.xpose.msra.mxu0 0.0
  %193 = vmatprep.mubr.f32.mxu0 0.0
  %194 = vmatmul.mubr.f32.gmra.mrb[0].mxu0 %v121
  %v195 = vpop.f32.mrb[0].mxu0
  %v196 = vadd.f32 0.0, %v195
  %v197 = vpop.f32.mrb[0].mxu0
  %198 = vmatprep.mubr.f32.mxu0 0.0
  %199 = vmatmul.mubr.f32.gmra.mrb[0].mxu0 %v124
  %v200 = vpop.f32.mrb[0].mxu0
  %v201 = vadd.f32 0.0, %v200
  %v202 = vpop.f32.mrb[0].mxu0
  %203 = vdwg.mxu0
  %v205 = vsel %vm35, %v32, 0
  %v208 = vsel %vm35, %v33, 0
  %v211 = vsel %vm35, %v34, 0
  %213 = vmatprep.subr.mxu0 0.0
  %214 = vmatpush1.xpose.msra.mxu0 %v211
  %215 = vmatprep.subr.mxu0 0.0
  %216 = vmatpush1.xpose.msra.mxu0 0.0
  %217 = vmatprep.subr.mxu0 0.0
  %218 = vmatpush1.xpose.msra.mxu0 0.0
  %219 = vmatprep.subr.mxu0 0.0
  %220 = vmatpush1.xpose.msra.mxu0 0.0
  %221 = vmatprep.subr.mxu0 0.0
  %222 = vmatpush1.xpose.msra.mxu0 0.0
  %223 = vmatprep.subr.mxu0 0.0
  %224 = vmatpush1.xpose.msra.mxu0 0.0
  %225 = vmatprep.subr.mxu0 0.0
  %226 = vmatpush1.xpose.msra.mxu0 0.0
  %227 = vmatprep.subr.mxu0 0.0
  %228 = vmatpush1.xpose.msra.mxu0 0.0
  %229 = vmatprep.subr.mxu0 0.0
  %230 = vmatpush1.xpose.msra.mxu0 0.0
  %231 = vmatprep.subr.mxu0 0.0
  %232 = vmatpush1.xpose.msra.mxu0 0.0
  %233 = vmatprep.subr.mxu0 0.0
  %234 = vmatpush1.xpose.msra.mxu0 0.0
  %235 = vmatprep.subr.mxu0 0.0
  %236 = vmatpush1.xpose.msra.mxu0 0.0
  %237 = vmatprep.subr.mxu0 0.0
  %238 = vmatpush1.xpose.msra.mxu0 0.0
  %239 = vmatprep.subr.mxu0 0.0
  %240 = vmatpush1.xpose.msra.mxu0 0.0
  %241 = vmatprep.subr.mxu0 0.0
  %242 = vmatpush1.xpose.msra.mxu0 0.0
  %243 = vmatprep.subr.mxu0 0.0
  %244 = vmatpush1.xpose.msra.mxu0 0.0
  %245 = vmatprep.subr.mxu0 0.0
  %246 = vmatpush1.xpose.msra.mxu0 0.0
  %247 = vmatprep.subr.mxu0 0.0
  %248 = vmatpush1.xpose.msra.mxu0 0.0
  %249 = vmatprep.subr.mxu0 0.0
  %250 = vmatpush1.xpose.msra.mxu0 0.0
  %251 = vmatprep.subr.mxu0 0.0
  %252 = vmatpush1.xpose.msra.mxu0 0.0
  %253 = vmatprep.subr.mxu0 0.0
  %254 = vmatpush1.xpose.msra.mxu0 0.0
  %255 = vmatprep.subr.mxu0 0.0
  %256 = vmatpush1.xpose.msra.mxu0 0.0
  %257 = vmatprep.subr.mxu0 0.0
  %258 = vmatpush1.xpose.msra.mxu0 0.0
  %259 = vmatprep.subr.mxu0 0.0
  %260 = vmatpush1.xpose.msra.mxu0 0.0
  %261 = vmatprep.subr.mxu0 0.0
  %262 = vmatpush1.xpose.msra.mxu0 0.0
  %263 = vmatprep.subr.mxu0 0.0
  %264 = vmatpush1.xpose.msra.mxu0 0.0
  %265 = vmatprep.subr.mxu0 0.0
  %266 = vmatpush1.xpose.msra.mxu0 0.0
  %267 = vmatprep.subr.mxu0 0.0
  %268 = vmatpush1.xpose.msra.mxu0 0.0
  %269 = vmatprep.subr.mxu0 0.0
  %270 = vmatpush1.xpose.msra.mxu0 0.0
  %271 = vmatprep.subr.mxu0 0.0
  %272 = vmatpush1.xpose.msra.mxu0 0.0
  %273 = vmatprep.subr.mxu0 0.0
  %274 = vmatpush1.xpose.msra.mxu0 0.0
  %275 = vmatprep.subr.mxu0 0.0
  %276 = vmatpush1.xpose.msra.mxu0 0.0
  %277 = vmatprep.mubr.f32.mxu0 0.0
  %278 = vmatmul.mubr.f32.gmra.mrb[0].mxu0 %v205
  %v279 = vpop.f32.mrb[0].mxu0
  %v280 = vadd.f32 0.0, %v279
  %v281 = vpop.f32.mrb[0].mxu0
  %282 = vmatprep.mubr.f32.mxu0 0.0
  %283 = vmatmul.mubr.f32.gmra.mrb[0].mxu0 %v208
  %v284 = vpop.f32.mrb[0].mxu0
  %v285 = vadd.f32 0.0, %v284
  %v286 = vpop.f32.mrb[0].mxu0
  %287 = vdwg.mxu0
  %v288 = vld [vmem:[%s1] sm:$0xff]
  %v289 = vld [vmem:[%s2] sm:$0x1]
  %v291 = vlaneseq
  %v292 = vshrl.u32 %v291, 7
  %v293 = vsub.s32 0, %v292
  %v294 = vrot.slane %v289, %v293
  %v297 = vsel %vm35, %v112, 0
  %v300 = vsel %vm35, %v117, 0
  %v303 = vsel %vm35, %v196, 0
  %v306 = vsel %vm35, %v201, 0
  %v309 = vsel %vm35, %v280, 0
  %v312 = vsel %vm35, %v285, 0
  %314 = vmatprep.subr.mxu0 0.0
  %315 = vmatpush1.msra.mxu0 %v288
  %316 = vmatprep.subr.mxu0 0.0
  %317 = vmatpush1.msra.mxu0 0.0
  %318 = vmatprep.subr.mxu0 0.0
  %319 = vmatpush1.msra.mxu0 0.0
  %320 = vmatprep.subr.mxu0 0.0
  %321 = vmatpush1.msra.mxu0 0.0
  %322 = vmatprep.subr.mxu0 0.0
  %323 = vmatpush1.msra.mxu0 0.0
  %324 = vmatprep.subr.mxu0 0.0
  %325 = vmatpush1.msra.mxu0 0.0
  %326 = vmatprep.subr.mxu0 0.0
  %327 = vmatpush1.msra.mxu0 0.0
  %328 = vmatprep.subr.mxu0 0.0
  %329 = vmatpush1.msra.mxu0 0.0
  %330 = vmatprep.subr.mxu0 0.0
  %331 = vmatpush1.msra.mxu0 0.0
  %332 = vmatprep.subr.mxu0 0.0
  %333 = vmatpush1.msra.mxu0 0.0
  %334 = vmatprep.subr.mxu0 0.0
  %335 = vmatpush1.msra.mxu0 0.0
  %336 = vmatprep.subr.mxu0 0.0
  %337 = vmatpush1.msra.mxu0 0.0
  %338 = vmatprep.subr.mxu0 0.0
  %339 = vmatpush1.msra.mxu0 0.0
  %340 = vmatprep.subr.mxu0 0.0
  %341 = vmatpush1.msra.mxu0 0.0
  %342 = vmatprep.subr.mxu0 0.0
  %343 = vmatpush1.msra.mxu0 0.0
  %344 = vmatprep.subr.mxu0 0.0
  %345 = vmatpush1.msra.mxu0 0.0
  %346 = vmatprep.subr.mxu0 0.0
  %347 = vmatpush1.msra.mxu0 0.0
  %348 = vmatprep.subr.mxu0 0.0
  %349 = vmatpush1.msra.mxu0 0.0
  %350 = vmatprep.subr.mxu0 0.0
  %351 = vmatpush1.msra.mxu0 0.0
  %352 = vmatprep.subr.mxu0 0.0
  %353 = vmatpush1.msra.mxu0 0.0
  %354 = vmatprep.subr.mxu0 0.0
  %355 = vmatpush1.msra.mxu0 0.0
  %356 = vmatprep.subr.mxu0 0.0
  %357 = vmatpush1.msra.mxu0 0.0
  %358 = vmatprep.subr.mxu0 0.0
  %359 = vmatpush1.msra.mxu0 0.0
  %360 = vmatprep.subr.mxu0 0.0
  %361 = vmatpush1.msra.mxu0 0.0
  %362 = vmatprep.subr.mxu0 0.0
  %363 = vmatpush1.msra.mxu0 0.0
  %364 = vmatprep.subr.mxu0 0.0
  %365 = vmatpush1.msra.mxu0 0.0
  %366 = vmatprep.subr.mxu0 0.0
  %367 = vmatpush1.msra.mxu0 0.0
  %368 = vmatprep.subr.mxu0 0.0
  %369 = vmatpush1.msra.mxu0 0.0
  %370 = vmatprep.subr.mxu0 0.0
  %371 = vmatpush1.msra.mxu0 0.0
  %372 = vmatprep.subr.mxu0 0.0
  %373 = vmatpush1.msra.mxu0 0.0
  %374 = vmatprep.subr.mxu0 0.0
  %375 = vmatpush1.msra.mxu0 0.0
  %376 = vmatprep.subr.mxu0 0.0
  %377 = vmatpush1.msra.mxu0 0.0
  %378 = vmatprep.mubr.f32.mxu0 0.0
  %379 = vmatmul.mubr.f32.gmra.mrb[0].mxu0 %v297
  %v380 = vpop.f32.mrb[0].mxu0
  %v381 = vadd.f32 %v294, %v380
  %v382 = vpop.f32.mrb[0].mxu0
  %383 = vmatprep.mubr.f32.mxu0 0.0
  %384 = vmatmul.mubr.f32.gmra.mrb[0].mxu0 %v300
  %v385 = vpop.f32.mrb[0].mxu0
  %v386 = vadd.f32 %v294, %v385
  %v387 = vpop.f32.mrb[0].mxu0
  %388 = vmatprep.mubr.f32.mxu0 0.0
  %389 = vmatmul.mubr.f32.gmra.mrb[0].mxu0 %v303
  %v390 = vpop.f32.mrb[0].mxu0
  %v391 = vadd.f32 %v294, %v390
  %v392 = vpop.f32.mrb[0].mxu0
  %393 = vmatprep.mubr.f32.mxu0 0.0
  %394 = vmatmul.mubr.f32.gmra.mrb[0].mxu0 %v306
  %v395 = vpop.f32.mrb[0].mxu0
  %v396 = vadd.f32 %v294, %v395
  %v397 = vpop.f32.mrb[0].mxu0
  %398 = vmatprep.mubr.f32.mxu0 0.0
  %399 = vmatmul.mubr.f32.gmra.mrb[0].mxu0 %v309
  %v400 = vpop.f32.mrb[0].mxu0
  %v401 = vadd.f32 %v294, %v400
  %v402 = vpop.f32.mrb[0].mxu0
  %403 = vmatprep.mubr.f32.mxu0 0.0
  %404 = vmatmul.mubr.f32.gmra.mrb[0].mxu0 %v312
  %v405 = vpop.f32.mrb[0].mxu0
  %v406 = vadd.f32 %v294, %v405
  %v407 = vpop.f32.mrb[0].mxu0
  %408 = vdwg.mxu0
  %v409 = vtanh.pop %v381
  %v410 = vtanh.pop %v386
  %v411 = vtanh.pop %v391
  %v412 = vtanh.pop %v396
  %v413 = vtanh.pop %v401
  %v414 = vtanh.pop %v406
  %v415 = vld [vmem:[%s3] sm:$0xff]
  %v416 = vld [vmem:[%s3 + $0x8] sm:$0xff]
  %v417 = vld [vmem:[%s3 + $0x10] sm:$0xff]
  %v418 = vld [vmem:[%s3 + $0x18] sm:$0xff]
  %v419 = vld [vmem:[%s4] sm:$0x1]
  %v421 = vlaneseq
  %v422 = vshrl.u32 %v421, 7
  %v423 = vsub.s32 0, %v422
  %v424 = vrot.slane %v419, %v423
  %vm426 = vcmask 261120
  %v428 = vsel %vm426, %v409, 0
  %v431 = vsel %vm426, %v410, 0
  %v434 = vsel %vm426, %v411, 0
  %v437 = vsel %vm426, %v412, 0
  %v440 = vsel %vm426, %v413, 0
  %v443 = vsel %vm426, %v414, 0
  %445 = vmatprep.subr.mxu0 0.0
  %446 = vmatpush1.msra.mxu0 %v415
  %447 = vmatprep.subr.mxu0 0.0
  %448 = vmatpush1.msra.mxu0 %v416
  %449 = vmatprep.subr.mxu0 0.0
  %450 = vmatpush1.msra.mxu0 %v417
  %451 = vmatprep.subr.mxu0 0.0
  %452 = vmatpush1.msra.mxu0 %v418
  %453 = vmatprep.subr.mxu0 0.0
  %454 = vmatpush1.msra.mxu0 0.0
  %455 = vmatprep.subr.mxu0 0.0
  %456 = vmatpush1.msra.mxu0 0.0
  %457 = vmatprep.subr.mxu0 0.0
  %458 = vmatpush1.msra.mxu0 0.0
  %459 = vmatprep.subr.mxu0 0.0
  %460 = vmatpush1.msra.mxu0 0.0
  %461 = vmatprep.subr.mxu0 0.0
  %462 = vmatpush1.msra.mxu0 0.0
  %463 = vmatprep.subr.mxu0 0.0
  %464 = vmatpush1.msra.mxu0 0.0
  %465 = vmatprep.subr.mxu0 0.0
  %466 = vmatpush1.msra.mxu0 0.0
  %467 = vmatprep.subr.mxu0 0.0
  %468 = vmatpush1.msra.mxu0 0.0
  %469 = vmatprep.subr.mxu0 0.0
  %470 = vmatpush1.msra.mxu0 0.0
  %471 = vmatprep.subr.mxu0 0.0
  %472 = vmatpush1.msra.mxu0 0.0
  %473 = vmatprep.subr.mxu0 0.0
  %474 = vmatpush1.msra.mxu0 0.0
  %475 = vmatprep.subr.mxu0 0.0
  %476 = vmatpush1.msra.mxu0 0.0
  %477 = vmatprep.subr.mxu0 0.0
  %478 = vmatpush1.msra.mxu0 0.0
  %479 = vmatprep.subr.mxu0 0.0
  %480 = vmatpush1.msra.mxu0 0.0
  %481 = vmatprep.subr.mxu0 0.0
  %482 = vmatpush1.msra.mxu0 0.0
  %483 = vmatprep.subr.mxu0 0.0
  %484 = vmatpush1.msra.mxu0 0.0
  %485 = vmatprep.subr.mxu0 0.0
  %486 = vmatpush1.msra.mxu0 0.0
  %487 = vmatprep.subr.mxu0 0.0
  %488 = vmatpush1.msra.mxu0 0.0
  %489 = vmatprep.subr.mxu0 0.0
  %490 = vmatpush1.msra.mxu0 0.0
  %491 = vmatprep.subr.mxu0 0.0
  %492 = vmatpush1.msra.mxu0 0.0
  %493 = vmatprep.subr.mxu0 0.0
  %494 = vmatpush1.msra.mxu0 0.0
  %495 = vmatprep.subr.mxu0 0.0
  %496 = vmatpush1.msra.mxu0 0.0
  %497 = vmatprep.subr.mxu0 0.0
  %498 = vmatpush1.msra.mxu0 0.0
  %499 = vmatprep.subr.mxu0 0.0
  %500 = vmatpush1.msra.mxu0 0.0
  %501 = vmatprep.subr.mxu0 0.0
  %502 = vmatpush1.msra.mxu0 0.0
  %503 = vmatprep.subr.mxu0 0.0
  %504 = vmatpush1.msra.mxu0 0.0
  %505 = vmatprep.subr.mxu0 0.0
  %506 = vmatpush1.msra.mxu0 0.0
  %507 = vmatprep.subr.mxu0 0.0
  %508 = vmatpush1.msra.mxu0 0.0
  %509 = vmatprep.mubr.f32.mxu0 0.0
  %510 = vmatmul.mubr.f32.gmra.mrb[0].mxu0 %v428
  %v511 = vpop.f32.mrb[0].mxu0
  %v512 = vadd.f32 %v424, %v511
  %v513 = vpop.f32.mrb[0].mxu0
  %514 = vmatprep.mubr.f32.mxu0 0.0
  %515 = vmatmul.mubr.f32.gmra.mrb[0].mxu0 %v431
  %v516 = vpop.f32.mrb[0].mxu0
  %v517 = vadd.f32 %v424, %v516
  %v518 = vpop.f32.mrb[0].mxu0
  %519 = vmatprep.mubr.f32.mxu0 0.0
  %520 = vmatmul.mubr.f32.gmra.mrb[0].mxu0 %v434
  %v521 = vpop.f32.mrb[0].mxu0
  %v522 = vadd.f32 %v424, %v521
  %v523 = vpop.f32.mrb[0].mxu0
  %524 = vmatprep.mubr.f32.mxu0 0.0
  %525 = vmatmul.mubr.f32.gmra.mrb[0].mxu0 %v437
  %v526 = vpop.f32.mrb[0].mxu0
  %v527 = vadd.f32 %v424, %v526
  %v528 = vpop.f32.mrb[0].mxu0
  %529 = vmatprep.mubr.f32.mxu0 0.0
  %530 = vmatmul.mubr.f32.gmra.mrb[0].mxu0 %v440
  %v531 = vpop.f32.mrb[0].mxu0
  %v532 = vadd.f32 %v424, %v531
  %v533 = vpop.f32.mrb[0].mxu0
  %534 = vmatprep.mubr.f32.mxu0 0.0
  %535 = vmatmul.mubr.f32.gmra.mrb[0].mxu0 %v443
  %v536 = vpop.f32.mrb[0].mxu0
  %v537 = vadd.f32 %v424, %v536
  %v538 = vpop.f32.mrb[0].mxu0
  %539 = vdwg.mxu0
  %540 = vst.msk [vmem:[%s7] sm:$0xff] %vm35, %v512
  %541 = vst.msk [vmem:[%s7 + $0x8] sm:$0xff] %vm35, %v517
  %542 = vst.msk [vmem:[%s7 + $0x18] sm:$0xff] %vm35, %v522
  %543 = vst.msk [vmem:[%s7 + $0x20] sm:$0xff] %vm35, %v527
  %544 = vst.msk [vmem:[%s7 + $0x30] sm:$0xff] %vm35, %v532
  %545 = vst.msk [vmem:[%s7 + $0x38] sm:$0xff] %vm35, %v537
  %v546 = vld [vmem:[%s5] sm:$0xff]
  %s547 = scalar_lea.vmem %s5, 8
  %v548 = vld [vmem:[%s547] sm:$0xff]
  %v552 = vrot.slane %v512, 1
  %vm553 = vcmask 1041409
  %v554 = vsel %vm553, %v522, %v552
  %v555 = vrot.slane %v532, 7
  %vm556 = vcmask 1042434
  %v557 = vsel %vm556, %v555, %v554
  %v558 = vsel %vm35, %v557, 0
  %560 = vmatprep.subr.mxu0 0.0
  %561 = vmatpush1.msra.mxu0 %v548
  %562 = vmatprep.subr.mxu0 0.0
  %563 = vmatpush1.msra.mxu0 0.0
  %564 = vmatprep.subr.mxu0 0.0
  %565 = vmatpush1.msra.mxu0 0.0
  %566 = vmatprep.subr.mxu0 0.0
  %567 = vmatpush1.msra.mxu0 0.0
  %568 = vmatprep.subr.mxu0 0.0
  %569 = vmatpush1.msra.mxu0 0.0
  %570 = vmatprep.subr.mxu0 0.0
  %571 = vmatpush1.msra.mxu0 0.0
  %572 = vmatprep.subr.mxu0 0.0
  %573 = vmatpush1.msra.mxu0 0.0
  %574 = vmatprep.subr.mxu0 0.0
  %575 = vmatpush1.msra.mxu0 0.0
  %576 = vmatprep.subr.mxu0 0.0
  %577 = vmatpush1.msra.mxu0 0.0
  %578 = vmatprep.subr.mxu0 0.0
  %579 = vmatpush1.msra.mxu0 0.0
  %580 = vmatprep.subr.mxu0 0.0
  %581 = vmatpush1.msra.mxu0 0.0
  %582 = vmatprep.subr.mxu0 0.0
  %583 = vmatpush1.msra.mxu0 0.0
  %584 = vmatprep.subr.mxu0 0.0
  %585 = vmatpush1.msra.mxu0 0.0
  %586 = vmatprep.subr.mxu0 0.0
  %587 = vmatpush1.msra.mxu0 0.0
  %588 = vmatprep.subr.mxu0 0.0
  %589 = vmatpush1.msra.mxu0 0.0
  %590 = vmatprep.subr.mxu0 0.0
  %591 = vmatpush1.msra.mxu0 0.0
  %592 = vmatprep.subr.mxu0 0.0
  %593 = vmatpush1.msra.mxu0 0.0
  %594 = vmatprep.subr.mxu0 0.0
  %595 = vmatpush1.msra.mxu0 0.0
  %596 = vmatprep.subr.mxu0 0.0
  %597 = vmatpush1.msra.mxu0 0.0
  %598 = vmatprep.subr.mxu0 0.0
  %599 = vmatpush1.msra.mxu0 0.0
  %600 = vmatprep.subr.mxu0 0.0
  %601 = vmatpush1.msra.mxu0 0.0
  %602 = vmatprep.subr.mxu0 0.0
  %603 = vmatpush1.msra.mxu0 0.0
  %604 = vmatprep.subr.mxu0 0.0
  %605 = vmatpush1.msra.mxu0 0.0
  %606 = vmatprep.subr.mxu0 0.0
  %607 = vmatpush1.msra.mxu0 0.0
  %608 = vmatprep.subr.mxu0 0.0
  %609 = vmatpush1.msra.mxu0 0.0
  %610 = vmatprep.subr.mxu0 0.0
  %611 = vmatpush1.msra.mxu0 0.0
  %612 = vmatprep.subr.mxu0 0.0
  %613 = vmatpush1.msra.mxu0 0.0
  %614 = vmatprep.subr.mxu0 0.0
  %615 = vmatpush1.msra.mxu0 0.0
  %616 = vmatprep.subr.mxu0 0.0
  %617 = vmatpush1.msra.mxu0 0.0
  %618 = vmatprep.subr.mxu0 0.0
  %619 = vmatpush1.msra.mxu0 0.0
  %620 = vmatprep.subr.mxu0 0.0
  %621 = vmatpush1.msra.mxu0 0.0
  %622 = vmatprep.subr.mxu0 0.0
  %623 = vmatpush1.msra.mxu0 0.0
  %624 = vmatprep.mubr.f32.mxu0 0.0
  %625 = vmatmul.mubr.f32.gmra.mrb[0].mxu0 %v558
  %v626 = vpop.f32.mrb[0].mxu0
  %v627 = vadd.f32 0.0, %v626
  %v628 = vpop.f32.mrb[0].mxu0
  %629 = vdwg.mxu0
  %v630 = vrot.slane %v522, 7
  %v631 = vsel %vm553, %v630, %v512
  %v632 = vrot.slane %v532, 6
  %v633 = vsel %vm556, %v632, %v631
  %v634 = vsel %vm35, %v633, 0
  %636 = vmatprep.subr.mxu0 0.0
  %637 = vmatpush1.msra.mxu0 %v546
  %638 = vmatprep.subr.mxu0 0.0
  %639 = vmatpush1.msra.mxu0 0.0
  %640 = vmatprep.subr.mxu0 0.0
  %641 = vmatpush1.msra.mxu0 0.0
  %642 = vmatprep.subr.mxu0 0.0
  %643 = vmatpush1.msra.mxu0 0.0
  %644 = vmatprep.subr.mxu0 0.0
  %645 = vmatpush1.msra.mxu0 0.0
  %646 = vmatprep.subr.mxu0 0.0
  %647 = vmatpush1.msra.mxu0 0.0
  %648 = vmatprep.subr.mxu0 0.0
  %649 = vmatpush1.msra.mxu0 0.0
  %650 = vmatprep.subr.mxu0 0.0
  %651 = vmatpush1.msra.mxu0 0.0
  %652 = vmatprep.subr.mxu0 0.0
  %653 = vmatpush1.msra.mxu0 0.0
  %654 = vmatprep.subr.mxu0 0.0
  %655 = vmatpush1.msra.mxu0 0.0
  %656 = vmatprep.subr.mxu0 0.0
  %657 = vmatpush1.msra.mxu0 0.0
  %658 = vmatprep.subr.mxu0 0.0
  %659 = vmatpush1.msra.mxu0 0.0
  %660 = vmatprep.subr.mxu0 0.0
  %661 = vmatpush1.msra.mxu0 0.0
  %662 = vmatprep.subr.mxu0 0.0
  %663 = vmatpush1.msra.mxu0 0.0
  %664 = vmatprep.subr.mxu0 0.0
  %665 = vmatpush1.msra.mxu0 0.0
  %666 = vmatprep.subr.mxu0 0.0
  %667 = vmatpush1.msra.mxu0 0.0
  %668 = vmatprep.subr.mxu0 0.0
  %669 = vmatpush1.msra.mxu0 0.0
  %670 = vmatprep.subr.mxu0 0.0
  %671 = vmatpush1.msra.mxu0 0.0
  %672 = vmatprep.subr.mxu0 0.0
  %673 = vmatpush1.msra.mxu0 0.0
  %674 = vmatprep.subr.mxu0 0.0
  %675 = vmatpush1.msra.mxu0 0.0
  %676 = vmatprep.subr.mxu0 0.0
  %677 = vmatpush1.msra.mxu0 0.0
  %678 = vmatprep.subr.mxu0 0.0
  %679 = vmatpush1.msra.mxu0 0.0
  %680 = vmatprep.subr.mxu0 0.0
  %681 = vmatpush1.msra.mxu0 0.0
  %682 = vmatprep.subr.mxu0 0.0
  %683 = vmatpush1.msra.mxu0 0.0
  %684 = vmatprep.subr.mxu0 0.0
  %685 = vmatpush1.msra.mxu0 0.0
  %686 = vmatprep.subr.mxu0 0.0
  %687 = vmatpush1.msra.mxu0 0.0
  %688 = vmatprep.subr.mxu0 0.0
  %689 = vmatpush1.msra.mxu0 0.0
  %690 = vmatprep.subr.mxu0 0.0
  %691 = vmatpush1.msra.mxu0 0.0
  %692 = vmatprep.subr.mxu0 0.0
  %693 = vmatpush1.msra.mxu0 0.0
  %694 = vmatprep.subr.mxu0 0.0
  %695 = vmatpush1.msra.mxu0 0.0
  %696 = vmatprep.subr.mxu0 0.0
  %697 = vmatpush1.msra.mxu0 0.0
  %698 = vmatprep.subr.mxu0 0.0
  %699 = vmatpush1.msra.mxu0 0.0
  %700 = vmatprep.mubr.f32.mxu0 0.0
  %701 = vmatmul.mubr.f32.gmra.mrb[0].mxu0 %v634
  %v702 = vpop.f32.mrb[0].mxu0
  %v703 = vadd.f32 %v627, %v702
  %v704 = vpop.f32.mrb[0].mxu0
  %705 = vdwg.mxu0
  %s706 = scalar_lea.vmem %s5, 16
  %v707 = vld [vmem:[%s706] sm:$0xff]
  %v708 = vrot.slane %v512, 2
  %v709 = vrot.slane %v522, 1
  %v710 = vsel %vm553, %v709, %v708
  %v711 = vsel %vm556, %v532, %v710
  %v712 = vsel %vm35, %v711, 0
  %714 = vmatprep.subr.mxu0 0.0
  %715 = vmatpush1.msra.mxu0 %v707
  %716 = vmatprep.subr.mxu0 0.0
  %717 = vmatpush1.msra.mxu0 0.0
  %718 = vmatprep.subr.mxu0 0.0
  %719 = vmatpush1.msra.mxu0 0.0
  %720 = vmatprep.subr.mxu0 0.0
  %721 = vmatpush1.msra.mxu0 0.0
  %722 = vmatprep.subr.mxu0 0.0
  %723 = vmatpush1.msra.mxu0 0.0
  %724 = vmatprep.subr.mxu0 0.0
  %725 = vmatpush1.msra.mxu0 0.0
  %726 = vmatprep.subr.mxu0 0.0
  %727 = vmatpush1.msra.mxu0 0.0
  %728 = vmatprep.subr.mxu0 0.0
  %729 = vmatpush1.msra.mxu0 0.0
  %730 = vmatprep.subr.mxu0 0.0
  %731 = vmatpush1.msra.mxu0 0.0
  %732 = vmatprep.subr.mxu0 0.0
  %733 = vmatpush1.msra.mxu0 0.0
  %734 = vmatprep.subr.mxu0 0.0
  %735 = vmatpush1.msra.mxu0 0.0
  %736 = vmatprep.subr.mxu0 0.0
  %737 = vmatpush1.msra.mxu0 0.0
  %738 = vmatprep.subr.mxu0 0.0
  %739 = vmatpush1.msra.mxu0 0.0
  %740 = vmatprep.subr.mxu0 0.0
  %741 = vmatpush1.msra.mxu0 0.0
  %742 = vmatprep.subr.mxu0 0.0
  %743 = vmatpush1.msra.mxu0 0.0
  %744 = vmatprep.subr.mxu0 0.0
  %745 = vmatpush1.msra.mxu0 0.0
  %746 = vmatprep.subr.mxu0 0.0
  %747 = vmatpush1.msra.mxu0 0.0
  %748 = vmatprep.subr.mxu0 0.0
  %749 = vmatpush1.msra.mxu0 0.0
  %750 = vmatprep.subr.mxu0 0.0
  %751 = vmatpush1.msra.mxu0 0.0
  %752 = vmatprep.subr.mxu0 0.0
  %753 = vmatpush1.msra.mxu0 0.0
  %754 = vmatprep.subr.mxu0 0.0
  %755 = vmatpush1.msra.mxu0 0.0
  %756 = vmatprep.subr.mxu0 0.0
  %757 = vmatpush1.msra.mxu0 0.0
  %758 = vmatprep.subr.mxu0 0.0
  %759 = vmatpush1.msra.mxu0 0.0
  %760 = vmatprep.subr.mxu0 0.0
  %761 = vmatpush1.msra.mxu0 0.0
  %762 = vmatprep.subr.mxu0 0.0
  %763 = vmatpush1.msra.mxu0 0.0
  %764 = vmatprep.subr.mxu0 0.0
  %765 = vmatpush1.msra.mxu0 0.0
  %766 = vmatprep.subr.mxu0 0.0
  %767 = vmatpush1.msra.mxu0 0.0
  %768 = vmatprep.subr.mxu0 0.0
  %769 = vmatpush1.msra.mxu0 0.0
  %770 = vmatprep.subr.mxu0 0.0
  %771 = vmatpush1.msra.mxu0 0.0
  %772 = vmatprep.subr.mxu0 0.0
  %773 = vmatpush1.msra.mxu0 0.0
  %774 = vmatprep.subr.mxu0 0.0
  %775 = vmatpush1.msra.mxu0 0.0
  %776 = vmatprep.subr.mxu0 0.0
  %777 = vmatpush1.msra.mxu0 0.0
  %778 = vmatprep.mubr.f32.mxu0 0.0
  %779 = vmatmul.mubr.f32.gmra.mrb[0].mxu0 %v712
  %v780 = vpop.f32.mrb[0].mxu0
  %v781 = vadd.f32 0.0, %v780
  %v782 = vpop.f32.mrb[0].mxu0
  %783 = vdwg.mxu0
  %v784 = vadd.f32 %v703, %v781
  %s785 = scalar_lea.vmem %s5, 24
  %v786 = vld [vmem:[%s785] sm:$0xff]
  %v787 = vrot.slane %v512, 3
  %v788 = vrot.slane %v522, 2
  %v789 = vsel %vm553, %v788, %v787
  %v790 = vrot.slane %v532, 1
  %v791 = vsel %vm556, %v790, %v789
  %v792 = vsel %vm35, %v791, 0
  %794 = vmatprep.subr.mxu0 0.0
  %795 = vmatpush1.msra.mxu0 %v786
  %796 = vmatprep.subr.mxu0 0.0
  %797 = vmatpush1.msra.mxu0 0.0
  %798 = vmatprep.subr.mxu0 0.0
  %799 = vmatpush1.msra.mxu0 0.0
  %800 = vmatprep.subr.mxu0 0.0
  %801 = vmatpush1.msra.mxu0 0.0
  %802 = vmatprep.subr.mxu0 0.0
  %803 = vmatpush1.msra.mxu0 0.0
  %804 = vmatprep.subr.mxu0 0.0
  %805 = vmatpush1.msra.mxu0 0.0
  %806 = vmatprep.subr.mxu0 0.0
  %807 = vmatpush1.msra.mxu0 0.0
  %808 = vmatprep.subr.mxu0 0.0
  %809 = vmatpush1.msra.mxu0 0.0
  %810 = vmatprep.subr.mxu0 0.0
  %811 = vmatpush1.msra.mxu0 0.0
  %812 = vmatprep.subr.mxu0 0.0
  %813 = vmatpush1.msra.mxu0 0.0
  %814 = vmatprep.subr.mxu0 0.0
  %815 = vmatpush1.msra.mxu0 0.0
  %816 = vmatprep.subr.mxu0 0.0
  %817 = vmatpush1.msra.mxu0 0.0
  %818 = vmatprep.subr.mxu0 0.0
  %819 = vmatpush1.msra.mxu0 0.0
  %820 = vmatprep.subr.mxu0 0.0
  %821 = vmatpush1.msra.mxu0 0.0
  %822 = vmatprep.subr.mxu0 0.0
  %823 = vmatpush1.msra.mxu0 0.0
  %824 = vmatprep.subr.mxu0 0.0
  %825 = vmatpush1.msra.mxu0 0.0
  %826 = vmatprep.subr.mxu0 0.0
  %827 = vmatpush1.msra.mxu0 0.0
  %828 = vmatprep.subr.mxu0 0.0
  %829 = vmatpush1.msra.mxu0 0.0
  %830 = vmatprep.subr.mxu0 0.0
  %831 = vmatpush1.msra.mxu0 0.0
  %832 = vmatprep.subr.mxu0 0.0
  %833 = vmatpush1.msra.mxu0 0.0
  %834 = vmatprep.subr.mxu0 0.0
  %835 = vmatpush1.msra.mxu0 0.0
  %836 = vmatprep.subr.mxu0 0.0
  %837 = vmatpush1.msra.mxu0 0.0
  %838 = vmatprep.subr.mxu0 0.0
  %839 = vmatpush1.msra.mxu0 0.0
  %840 = vmatprep.subr.mxu0 0.0
  %841 = vmatpush1.msra.mxu0 0.0
  %842 = vmatprep.subr.mxu0 0.0
  %843 = vmatpush1.msra.mxu0 0.0
  %844 = vmatprep.subr.mxu0 0.0
  %845 = vmatpush1.msra.mxu0 0.0
  %846 = vmatprep.subr.mxu0 0.0
  %847 = vmatpush1.msra.mxu0 0.0
  %848 = vmatprep.subr.mxu0 0.0
  %849 = vmatpush1.msra.mxu0 0.0
  %850 = vmatprep.subr.mxu0 0.0
  %851 = vmatpush1.msra.mxu0 0.0
  %852 = vmatprep.subr.mxu0 0.0
  %853 = vmatpush1.msra.mxu0 0.0
  %854 = vmatprep.subr.mxu0 0.0
  %855 = vmatpush1.msra.mxu0 0.0
  %856 = vmatprep.subr.mxu0 0.0
  %857 = vmatpush1.msra.mxu0 0.0
  %858 = vmatprep.mubr.f32.mxu0 0.0
  %859 = vmatmul.mubr.f32.gmra.mrb[0].mxu0 %v792
  %v860 = vpop.f32.mrb[0].mxu0
  %v861 = vadd.f32 0.0, %v860
  %v862 = vpop.f32.mrb[0].mxu0
  %863 = vdwg.mxu0
  %v864 = vadd.f32 %v784, %v861
  %s865 = scalar_lea.vmem %s5, 32
  %v866 = vld [vmem:[%s865] sm:$0xff]
  %v867 = vrot.slane %v512, 4
  %v868 = vrot.slane %v522, 3
  %v869 = vsel %vm553, %v868, %v867
  %v870 = vrot.slane %v532, 2
  %v871 = vsel %vm556, %v870, %v869
  %v872 = vsel %vm35, %v871, 0
  %874 = vmatprep.subr.mxu0 0.0
  %875 = vmatpush1.msra.mxu0 %v866
  %876 = vmatprep.subr.mxu0 0.0
  %877 = vmatpush1.msra.mxu0 0.0
  %878 = vmatprep.subr.mxu0 0.0
  %879 = vmatpush1.msra.mxu0 0.0
  %880 = vmatprep.subr.mxu0 0.0
  %881 = vmatpush1.msra.mxu0 0.0
  %882 = vmatprep.subr.mxu0 0.0
  %883 = vmatpush1.msra.mxu0 0.0
  %884 = vmatprep.subr.mxu0 0.0
  %885 = vmatpush1.msra.mxu0 0.0
  %886 = vmatprep.subr.mxu0 0.0
  %887 = vmatpush1.msra.mxu0 0.0
  %888 = vmatprep.subr.mxu0 0.0
  %889 = vmatpush1.msra.mxu0 0.0
  %890 = vmatprep.subr.mxu0 0.0
  %891 = vmatpush1.msra.mxu0 0.0
  %892 = vmatprep.subr.mxu0 0.0
  %893 = vmatpush1.msra.mxu0 0.0
  %894 = vmatprep.subr.mxu0 0.0
  %895 = vmatpush1.msra.mxu0 0.0
  %896 = vmatprep.subr.mxu0 0.0
  %897 = vmatpush1.msra.mxu0 0.0
  %898 = vmatprep.subr.mxu0 0.0
  %899 = vmatpush1.msra.mxu0 0.0
  %900 = vmatprep.subr.mxu0 0.0
  %901 = vmatpush1.msra.mxu0 0.0
  %902 = vmatprep.subr.mxu0 0.0
  %903 = vmatpush1.msra.mxu0 0.0
  %904 = vmatprep.subr.mxu0 0.0
  %905 = vmatpush1.msra.mxu0 0.0
  %906 = vmatprep.subr.mxu0 0.0
  %907 = vmatpush1.msra.mxu0 0.0
  %908 = vmatprep.subr.mxu0 0.0
  %909 = vmatpush1.msra.mxu0 0.0
  %910 = vmatprep.subr.mxu0 0.0
  %911 = vmatpush1.msra.mxu0 0.0
  %912 = vmatprep.subr.mxu0 0.0
  %913 = vmatpush1.msra.mxu0 0.0
  %914 = vmatprep.subr.mxu0 0.0
  %915 = vmatpush1.msra.mxu0 0.0
  %916 = vmatprep.subr.mxu0 0.0
  %917 = vmatpush1.msra.mxu0 0.0
  %918 = vmatprep.subr.mxu0 0.0
  %919 = vmatpush1.msra.mxu0 0.0
  %920 = vmatprep.subr.mxu0 0.0
  %921 = vmatpush1.msra.mxu0 0.0
  %922 = vmatprep.subr.mxu0 0.0
  %923 = vmatpush1.msra.mxu0 0.0
  %924 = vmatprep.subr.mxu0 0.0
  %925 = vmatpush1.msra.mxu0 0.0
  %926 = vmatprep.subr.mxu0 0.0
  %927 = vmatpush1.msra.mxu0 0.0
  %928 = vmatprep.subr.mxu0 0.0
  %929 = vmatpush1.msra.mxu0 0.0
  %930 = vmatprep.subr.mxu0 0.0
  %931 = vmatpush1.msra.mxu0 0.0
  %932 = vmatprep.subr.mxu0 0.0
  %933 = vmatpush1.msra.mxu0 0.0
  %934 = vmatprep.subr.mxu0 0.0
  %935 = vmatpush1.msra.mxu0 0.0
  %936 = vmatprep.subr.mxu0 0.0
  %937 = vmatpush1.msra.mxu0 0.0
  %938 = vmatprep.mubr.f32.mxu0 0.0
  %939 = vmatmul.mubr.f32.gmra.mrb[0].mxu0 %v872
  %v940 = vpop.f32.mrb[0].mxu0
  %v941 = vadd.f32 0.0, %v940
  %v942 = vpop.f32.mrb[0].mxu0
  %943 = vdwg.mxu0
  %v944 = vadd.f32 %v864, %v941
  %s945 = scalar_lea.vmem %s5, 40
  %v946 = vld [vmem:[%s945] sm:$0xff]
  %v947 = vrot.slane %v512, 5
  %v948 = vrot.slane %v522, 4
  %v949 = vsel %vm553, %v948, %v947
  %v950 = vrot.slane %v532, 3
  %v951 = vsel %vm556, %v950, %v949
  %v952 = vsel %vm35, %v951, 0
  %954 = vmatprep.subr.mxu0 0.0
  %955 = vmatpush1.msra.mxu0 %v946
  %956 = vmatprep.subr.mxu0 0.0
  %957 = vmatpush1.msra.mxu0 0.0
  %958 = vmatprep.subr.mxu0 0.0
  %959 = vmatpush1.msra.mxu0 0.0
  %960 = vmatprep.subr.mxu0 0.0
  %961 = vmatpush1.msra.mxu0 0.0
  %962 = vmatprep.subr.mxu0 0.0
  %963 = vmatpush1.msra.mxu0 0.0
  %964 = vmatprep.subr.mxu0 0.0
  %965 = vmatpush1.msra.mxu0 0.0
  %966 = vmatprep.subr.mxu0 0.0
  %967 = vmatpush1.msra.mxu0 0.0
  %968 = vmatprep.subr.mxu0 0.0
  %969 = vmatpush1.msra.mxu0 0.0
  %970 = vmatprep.subr.mxu0 0.0
  %971 = vmatpush1.msra.mxu0 0.0
  %972 = vmatprep.subr.mxu0 0.0
  %973 = vmatpush1.msra.mxu0 0.0
  %974 = vmatprep.subr.mxu0 0.0
  %975 = vmatpush1.msra.mxu0 0.0
  %976 = vmatprep.subr.mxu0 0.0
  %977 = vmatpush1.msra.mxu0 0.0
  %978 = vmatprep.subr.mxu0 0.0
  %979 = vmatpush1.msra.mxu0 0.0
  %980 = vmatprep.subr.mxu0 0.0
  %981 = vmatpush1.msra.mxu0 0.0
  %982 = vmatprep.subr.mxu0 0.0
  %983 = vmatpush1.msra.mxu0 0.0
  %984 = vmatprep.subr.mxu0 0.0
  %985 = vmatpush1.msra.mxu0 0.0
  %986 = vmatprep.subr.mxu0 0.0
  %987 = vmatpush1.msra.mxu0 0.0
  %988 = vmatprep.subr.mxu0 0.0
  %989 = vmatpush1.msra.mxu0 0.0
  %990 = vmatprep.subr.mxu0 0.0
  %991 = vmatpush1.msra.mxu0 0.0
  %992 = vmatprep.subr.mxu0 0.0
  %993 = vmatpush1.msra.mxu0 0.0
  %994 = vmatprep.subr.mxu0 0.0
  %995 = vmatpush1.msra.mxu0 0.0
  %996 = vmatprep.subr.mxu0 0.0
  %997 = vmatpush1.msra.mxu0 0.0
  %998 = vmatprep.subr.mxu0 0.0
  %999 = vmatpush1.msra.mxu0 0.0
  %1000 = vmatprep.subr.mxu0 0.0
  %1001 = vmatpush1.msra.mxu0 0.0
  %1002 = vmatprep.subr.mxu0 0.0
  %1003 = vmatpush1.msra.mxu0 0.0
  %1004 = vmatprep.subr.mxu0 0.0
  %1005 = vmatpush1.msra.mxu0 0.0
  %1006 = vmatprep.subr.mxu0 0.0
  %1007 = vmatpush1.msra.mxu0 0.0
  %1008 = vmatprep.subr.mxu0 0.0
  %1009 = vmatpush1.msra.mxu0 0.0
  %1010 = vmatprep.subr.mxu0 0.0
  %1011 = vmatpush1.msra.mxu0 0.0
  %1012 = vmatprep.subr.mxu0 0.0
  %1013 = vmatpush1.msra.mxu0 0.0
  %1014 = vmatprep.subr.mxu0 0.0
  %1015 = vmatpush1.msra.mxu0 0.0
  %1016 = vmatprep.subr.mxu0 0.0
  %1017 = vmatpush1.msra.mxu0 0.0
  %1018 = vmatprep.mubr.f32.mxu0 0.0
  %1019 = vmatmul.mubr.f32.gmra.mrb[0].mxu0 %v952
  %v1020 = vpop.f32.mrb[0].mxu0
  %v1021 = vadd.f32 0.0, %v1020
  %v1022 = vpop.f32.mrb[0].mxu0
  %1023 = vdwg.mxu0
  %v1024 = vadd.f32 %v944, %v1021
  %s1025 = scalar_lea.vmem %s5, 48
  %v1026 = vld [vmem:[%s1025] sm:$0xff]
  %v1027 = vrot.slane %v512, 6
  %v1028 = vrot.slane %v522, 5
  %v1029 = vsel %vm553, %v1028, %v1027
  %v1030 = vrot.slane %v532, 4
  %v1031 = vsel %vm556, %v1030, %v1029
  %v1032 = vsel %vm35, %v1031, 0
  %1034 = vmatprep.subr.mxu0 0.0
  %1035 = vmatpush1.msra.mxu0 %v1026
  %1036 = vmatprep.subr.mxu0 0.0
  %1037 = vmatpush1.msra.mxu0 0.0
  %1038 = vmatprep.subr.mxu0 0.0
  %1039 = vmatpush1.msra.mxu0 0.0
  %1040 = vmatprep.subr.mxu0 0.0
  %1041 = vmatpush1.msra.mxu0 0.0
  %1042 = vmatprep.subr.mxu0 0.0
  %1043 = vmatpush1.msra.mxu0 0.0
  %1044 = vmatprep.subr.mxu0 0.0
  %1045 = vmatpush1.msra.mxu0 0.0
  %1046 = vmatprep.subr.mxu0 0.0
  %1047 = vmatpush1.msra.mxu0 0.0
  %1048 = vmatprep.subr.mxu0 0.0
  %1049 = vmatpush1.msra.mxu0 0.0
  %1050 = vmatprep.subr.mxu0 0.0
  %1051 = vmatpush1.msra.mxu0 0.0
  %1052 = vmatprep.subr.mxu0 0.0
  %1053 = vmatpush1.msra.mxu0 0.0
  %1054 = vmatprep.subr.mxu0 0.0
  %1055 = vmatpush1.msra.mxu0 0.0
  %1056 = vmatprep.subr.mxu0 0.0
  %1057 = vmatpush1.msra.mxu0 0.0
  %1058 = vmatprep.subr.mxu0 0.0
  %1059 = vmatpush1.msra.mxu0 0.0
  %1060 = vmatprep.subr.mxu0 0.0
  %1061 = vmatpush1.msra.mxu0 0.0
  %1062 = vmatprep.subr.mxu0 0.0
  %1063 = vmatpush1.msra.mxu0 0.0
  %1064 = vmatprep.subr.mxu0 0.0
  %1065 = vmatpush1.msra.mxu0 0.0
  %1066 = vmatprep.subr.mxu0 0.0
  %1067 = vmatpush1.msra.mxu0 0.0
  %1068 = vmatprep.subr.mxu0 0.0
  %1069 = vmatpush1.msra.mxu0 0.0
  %1070 = vmatprep.subr.mxu0 0.0
  %1071 = vmatpush1.msra.mxu0 0.0
  %1072 = vmatprep.subr.mxu0 0.0
  %1073 = vmatpush1.msra.mxu0 0.0
  %1074 = vmatprep.subr.mxu0 0.0
  %1075 = vmatpush1.msra.mxu0 0.0
  %1076 = vmatprep.subr.mxu0 0.0
  %1077 = vmatpush1.msra.mxu0 0.0
  %1078 = vmatprep.subr.mxu0 0.0
  %1079 = vmatpush1.msra.mxu0 0.0
  %1080 = vmatprep.subr.mxu0 0.0
  %1081 = vmatpush1.msra.mxu0 0.0
  %1082 = vmatprep.subr.mxu0 0.0
  %1083 = vmatpush1.msra.mxu0 0.0
  %1084 = vmatprep.subr.mxu0 0.0
  %1085 = vmatpush1.msra.mxu0 0.0
  %1086 = vmatprep.subr.mxu0 0.0
  %1087 = vmatpush1.msra.mxu0 0.0
  %1088 = vmatprep.subr.mxu0 0.0
  %1089 = vmatpush1.msra.mxu0 0.0
  %1090 = vmatprep.subr.mxu0 0.0
  %1091 = vmatpush1.msra.mxu0 0.0
  %1092 = vmatprep.subr.mxu0 0.0
  %1093 = vmatpush1.msra.mxu0 0.0
  %1094 = vmatprep.subr.mxu0 0.0
  %1095 = vmatpush1.msra.mxu0 0.0
  %1096 = vmatprep.subr.mxu0 0.0
  %1097 = vmatpush1.msra.mxu0 0.0
  %1098 = vmatprep.mubr.f32.mxu0 0.0
  %1099 = vmatmul.mubr.f32.gmra.mrb[0].mxu0 %v1032
  %v1100 = vpop.f32.mrb[0].mxu0
  %v1101 = vadd.f32 0.0, %v1100
  %v1102 = vpop.f32.mrb[0].mxu0
  %1103 = vdwg.mxu0
  %v1104 = vadd.f32 %v1024, %v1101
  %s1105 = scalar_lea.vmem %s5, 56
  %v1106 = vld [vmem:[%s1105] sm:$0xff]
  %v1107 = vrot.slane %v512, 7
  %v1108 = vrot.slane %v522, 6
  %v1109 = vsel %vm553, %v1108, %v1107
  %v1110 = vrot.slane %v532, 5
  %v1111 = vsel %vm556, %v1110, %v1109
  %v1112 = vsel %vm35, %v1111, 0
  %1114 = vmatprep.subr.mxu0 0.0
  %1115 = vmatpush1.msra.mxu0 %v1106
  %1116 = vmatprep.subr.mxu0 0.0
  %1117 = vmatpush1.msra.mxu0 0.0
  %1118 = vmatprep.subr.mxu0 0.0
  %1119 = vmatpush1.msra.mxu0 0.0
  %1120 = vmatprep.subr.mxu0 0.0
  %1121 = vmatpush1.msra.mxu0 0.0
  %1122 = vmatprep.subr.mxu0 0.0
  %1123 = vmatpush1.msra.mxu0 0.0
  %1124 = vmatprep.subr.mxu0 0.0
  %1125 = vmatpush1.msra.mxu0 0.0
  %1126 = vmatprep.subr.mxu0 0.0
  %1127 = vmatpush1.msra.mxu0 0.0
  %1128 = vmatprep.subr.mxu0 0.0
  %1129 = vmatpush1.msra.mxu0 0.0
  %1130 = vmatprep.subr.mxu0 0.0
  %1131 = vmatpush1.msra.mxu0 0.0
  %1132 = vmatprep.subr.mxu0 0.0
  %1133 = vmatpush1.msra.mxu0 0.0
  %1134 = vmatprep.subr.mxu0 0.0
  %1135 = vmatpush1.msra.mxu0 0.0
  %1136 = vmatprep.subr.mxu0 0.0
  %1137 = vmatpush1.msra.mxu0 0.0
  %1138 = vmatprep.subr.mxu0 0.0
  %1139 = vmatpush1.msra.mxu0 0.0
  %1140 = vmatprep.subr.mxu0 0.0
  %1141 = vmatpush1.msra.mxu0 0.0
  %1142 = vmatprep.subr.mxu0 0.0
  %1143 = vmatpush1.msra.mxu0 0.0
  %1144 = vmatprep.subr.mxu0 0.0
  %1145 = vmatpush1.msra.mxu0 0.0
  %1146 = vmatprep.subr.mxu0 0.0
  %1147 = vmatpush1.msra.mxu0 0.0
  %1148 = vmatprep.subr.mxu0 0.0
  %1149 = vmatpush1.msra.mxu0 0.0
  %1150 = vmatprep.subr.mxu0 0.0
  %1151 = vmatpush1.msra.mxu0 0.0
  %1152 = vmatprep.subr.mxu0 0.0
  %1153 = vmatpush1.msra.mxu0 0.0
  %1154 = vmatprep.subr.mxu0 0.0
  %1155 = vmatpush1.msra.mxu0 0.0
  %1156 = vmatprep.subr.mxu0 0.0
  %1157 = vmatpush1.msra.mxu0 0.0
  %1158 = vmatprep.subr.mxu0 0.0
  %1159 = vmatpush1.msra.mxu0 0.0
  %1160 = vmatprep.subr.mxu0 0.0
  %1161 = vmatpush1.msra.mxu0 0.0
  %1162 = vmatprep.subr.mxu0 0.0
  %1163 = vmatpush1.msra.mxu0 0.0
  %1164 = vmatprep.subr.mxu0 0.0
  %1165 = vmatpush1.msra.mxu0 0.0
  %1166 = vmatprep.subr.mxu0 0.0
  %1167 = vmatpush1.msra.mxu0 0.0
  %1168 = vmatprep.subr.mxu0 0.0
  %1169 = vmatpush1.msra.mxu0 0.0
  %1170 = vmatprep.subr.mxu0 0.0
  %1171 = vmatpush1.msra.mxu0 0.0
  %1172 = vmatprep.subr.mxu0 0.0
  %1173 = vmatpush1.msra.mxu0 0.0
  %1174 = vmatprep.subr.mxu0 0.0
  %1175 = vmatpush1.msra.mxu0 0.0
  %1176 = vmatprep.subr.mxu0 0.0
  %1177 = vmatpush1.msra.mxu0 0.0
  %1178 = vmatprep.mubr.f32.mxu0 0.0
  %1179 = vmatmul.mubr.f32.gmra.mrb[0].mxu0 %v1112
  %v1180 = vpop.f32.mrb[0].mxu0
  %v1181 = vadd.f32 0.0, %v1180
  %v1182 = vpop.f32.mrb[0].mxu0
  %1183 = vdwg.mxu0
  %v1184 = vadd.f32 %v1104, %v1181
  %s1185 = scalar_lea.vmem %s5, 64
  %v1186 = vld [vmem:[%s1185] sm:$0xff]
  %v1190 = vrot.slane %v527, 7
  %v1191 = vsel %vm553, %v1190, %v517
  %v1192 = vrot.slane %v537, 6
  %v1193 = vsel %vm556, %v1192, %v1191
  %v1194 = vsel %vm35, %v1193, 0
  %1196 = vmatprep.subr.mxu0 0.0
  %1197 = vmatpush1.msra.mxu0 %v1186
  %1198 = vmatprep.subr.mxu0 0.0
  %1199 = vmatpush1.msra.mxu0 0.0
  %1200 = vmatprep.subr.mxu0 0.0
  %1201 = vmatpush1.msra.mxu0 0.0
  %1202 = vmatprep.subr.mxu0 0.0
  %1203 = vmatpush1.msra.mxu0 0.0
  %1204 = vmatprep.subr.mxu0 0.0
  %1205 = vmatpush1.msra.mxu0 0.0
  %1206 = vmatprep.subr.mxu0 0.0
  %1207 = vmatpush1.msra.mxu0 0.0
  %1208 = vmatprep.subr.mxu0 0.0
  %1209 = vmatpush1.msra.mxu0 0.0
  %1210 = vmatprep.subr.mxu0 0.0
  %1211 = vmatpush1.msra.mxu0 0.0
  %1212 = vmatprep.subr.mxu0 0.0
  %1213 = vmatpush1.msra.mxu0 0.0
  %1214 = vmatprep.subr.mxu0 0.0
  %1215 = vmatpush1.msra.mxu0 0.0
  %1216 = vmatprep.subr.mxu0 0.0
  %1217 = vmatpush1.msra.mxu0 0.0
  %1218 = vmatprep.subr.mxu0 0.0
  %1219 = vmatpush1.msra.mxu0 0.0
  %1220 = vmatprep.subr.mxu0 0.0
  %1221 = vmatpush1.msra.mxu0 0.0
  %1222 = vmatprep.subr.mxu0 0.0
  %1223 = vmatpush1.msra.mxu0 0.0
  %1224 = vmatprep.subr.mxu0 0.0
  %1225 = vmatpush1.msra.mxu0 0.0
  %1226 = vmatprep.subr.mxu0 0.0
  %1227 = vmatpush1.msra.mxu0 0.0
  %1228 = vmatprep.subr.mxu0 0.0
  %1229 = vmatpush1.msra.mxu0 0.0
  %1230 = vmatprep.subr.mxu0 0.0
  %1231 = vmatpush1.msra.mxu0 0.0
  %1232 = vmatprep.subr.mxu0 0.0
  %1233 = vmatpush1.msra.mxu0 0.0
  %1234 = vmatprep.subr.mxu0 0.0
  %1235 = vmatpush1.msra.mxu0 0.0
  %1236 = vmatprep.subr.mxu0 0.0
  %1237 = vmatpush1.msra.mxu0 0.0
  %1238 = vmatprep.subr.mxu0 0.0
  %1239 = vmatpush1.msra.mxu0 0.0
  %1240 = vmatprep.subr.mxu0 0.0
  %1241 = vmatpush1.msra.mxu0 0.0
  %1242 = vmatprep.subr.mxu0 0.0
  %1243 = vmatpush1.msra.mxu0 0.0
  %1244 = vmatprep.subr.mxu0 0.0
  %1245 = vmatpush1.msra.mxu0 0.0
  %1246 = vmatprep.subr.mxu0 0.0
  %1247 = vmatpush1.msra.mxu0 0.0
  %1248 = vmatprep.subr.mxu0 0.0
  %1249 = vmatpush1.msra.mxu0 0.0
  %1250 = vmatprep.subr.mxu0 0.0
  %1251 = vmatpush1.msra.mxu0 0.0
  %1252 = vmatprep.subr.mxu0 0.0
  %1253 = vmatpush1.msra.mxu0 0.0
  %1254 = vmatprep.subr.mxu0 0.0
  %1255 = vmatpush1.msra.mxu0 0.0
  %1256 = vmatprep.subr.mxu0 0.0
  %1257 = vmatpush1.msra.mxu0 0.0
  %1258 = vmatprep.subr.mxu0 0.0
  %1259 = vmatpush1.msra.mxu0 0.0
  %1260 = vmatprep.mubr.f32.mxu0 0.0
  %1261 = vmatmul.mubr.f32.gmra.mrb[0].mxu0 %v1194
  %v1262 = vpop.f32.mrb[0].mxu0
  %v1263 = vadd.f32 0.0, %v1262
  %v1264 = vpop.f32.mrb[0].mxu0
  %1265 = vdwg.mxu0
  %v1266 = vadd.f32 %v1184, %v1263
  %s1267 = scalar_lea.vmem %s5, 72
  %v1268 = vld [vmem:[%s1267] sm:$0xff]
  %v1269 = vrot.slane %v517, 1
  %v1270 = vsel %vm553, %v527, %v1269
  %v1271 = vrot.slane %v537, 7
  %v1272 = vsel %vm556, %v1271, %v1270
  %v1273 = vsel %vm35, %v1272, 0
  %1275 = vmatprep.subr.mxu0 0.0
  %1276 = vmatpush1.msra.mxu0 %v1268
  %1277 = vmatprep.subr.mxu0 0.0
  %1278 = vmatpush1.msra.mxu0 0.0
  %1279 = vmatprep.subr.mxu0 0.0
  %1280 = vmatpush1.msra.mxu0 0.0
  %1281 = vmatprep.subr.mxu0 0.0
  %1282 = vmatpush1.msra.mxu0 0.0
  %1283 = vmatprep.subr.mxu0 0.0
  %1284 = vmatpush1.msra.mxu0 0.0
  %1285 = vmatprep.subr.mxu0 0.0
  %1286 = vmatpush1.msra.mxu0 0.0
  %1287 = vmatprep.subr.mxu0 0.0
  %1288 = vmatpush1.msra.mxu0 0.0
  %1289 = vmatprep.subr.mxu0 0.0
  %1290 = vmatpush1.msra.mxu0 0.0
  %1291 = vmatprep.subr.mxu0 0.0
  %1292 = vmatpush1.msra.mxu0 0.0
  %1293 = vmatprep.subr.mxu0 0.0
  %1294 = vmatpush1.msra.mxu0 0.0
  %1295 = vmatprep.subr.mxu0 0.0
  %1296 = vmatpush1.msra.mxu0 0.0
  %1297 = vmatprep.subr.mxu0 0.0
  %1298 = vmatpush1.msra.mxu0 0.0
  %1299 = vmatprep.subr.mxu0 0.0
  %1300 = vmatpush1.msra.mxu0 0.0
  %1301 = vmatprep.subr.mxu0 0.0
  %1302 = vmatpush1.msra.mxu0 0.0
  %1303 = vmatprep.subr.mxu0 0.0
  %1304 = vmatpush1.msra.mxu0 0.0
  %1305 = vmatprep.subr.mxu0 0.0
  %1306 = vmatpush1.msra.mxu0 0.0
  %1307 = vmatprep.subr.mxu0 0.0
  %1308 = vmatpush1.msra.mxu0 0.0
  %1309 = vmatprep.subr.mxu0 0.0
  %1310 = vmatpush1.msra.mxu0 0.0
  %1311 = vmatprep.subr.mxu0 0.0
  %1312 = vmatpush1.msra.mxu0 0.0
  %1313 = vmatprep.subr.mxu0 0.0
  %1314 = vmatpush1.msra.mxu0 0.0
  %1315 = vmatprep.subr.mxu0 0.0
  %1316 = vmatpush1.msra.mxu0 0.0
  %1317 = vmatprep.subr.mxu0 0.0
  %1318 = vmatpush1.msra.mxu0 0.0
  %1319 = vmatprep.subr.mxu0 0.0
  %1320 = vmatpush1.msra.mxu0 0.0
  %1321 = vmatprep.subr.mxu0 0.0
  %1322 = vmatpush1.msra.mxu0 0.0
  %1323 = vmatprep.subr.mxu0 0.0
  %1324 = vmatpush1.msra.mxu0 0.0
  %1325 = vmatprep.subr.mxu0 0.0
  %1326 = vmatpush1.msra.mxu0 0.0
  %1327 = vmatprep.subr.mxu0 0.0
  %1328 = vmatpush1.msra.mxu0 0.0
  %1329 = vmatprep.subr.mxu0 0.0
  %1330 = vmatpush1.msra.mxu0 0.0
  %1331 = vmatprep.subr.mxu0 0.0
  %1332 = vmatpush1.msra.mxu0 0.0
  %1333 = vmatprep.subr.mxu0 0.0
  %1334 = vmatpush1.msra.mxu0 0.0
  %1335 = vmatprep.subr.mxu0 0.0
  %1336 = vmatpush1.msra.mxu0 0.0
  %1337 = vmatprep.subr.mxu0 0.0
  %1338 = vmatpush1.msra.mxu0 0.0
  %1339 = vmatprep.mubr.f32.mxu0 0.0
  %1340 = vmatmul.mubr.f32.gmra.mrb[0].mxu0 %v1273
  %v1341 = vpop.f32.mrb[0].mxu0
  %v1342 = vadd.f32 0.0, %v1341
  %v1343 = vpop.f32.mrb[0].mxu0
  %1344 = vdwg.mxu0
  %v1345 = vadd.f32 %v1266, %v1342
  %s1346 = scalar_lea.vmem %s5, 80
  %v1347 = vld [vmem:[%s1346] sm:$0xff]
  %v1348 = vrot.slane %v517, 2
  %v1349 = vrot.slane %v527, 1
  %v1350 = vsel %vm553, %v1349, %v1348
  %v1351 = vsel %vm556, %v537, %v1350
  %v1352 = vsel %vm35, %v1351, 0
  %1354 = vmatprep.subr.mxu0 0.0
  %1355 = vmatpush1.msra.mxu0 %v1347
  %1356 = vmatprep.subr.mxu0 0.0
  %1357 = vmatpush1.msra.mxu0 0.0
  %1358 = vmatprep.subr.mxu0 0.0
  %1359 = vmatpush1.msra.mxu0 0.0
  %1360 = vmatprep.subr.mxu0 0.0
  %1361 = vmatpush1.msra.mxu0 0.0
  %1362 = vmatprep.subr.mxu0 0.0
  %1363 = vmatpush1.msra.mxu0 0.0
  %1364 = vmatprep.subr.mxu0 0.0
  %1365 = vmatpush1.msra.mxu0 0.0
  %1366 = vmatprep.subr.mxu0 0.0
  %1367 = vmatpush1.msra.mxu0 0.0
  %1368 = vmatprep.subr.mxu0 0.0
  %1369 = vmatpush1.msra.mxu0 0.0
  %1370 = vmatprep.subr.mxu0 0.0
  %1371 = vmatpush1.msra.mxu0 0.0
  %1372 = vmatprep.subr.mxu0 0.0
  %1373 = vmatpush1.msra.mxu0 0.0
  %1374 = vmatprep.subr.mxu0 0.0
  %1375 = vmatpush1.msra.mxu0 0.0
  %1376 = vmatprep.subr.mxu0 0.0
  %1377 = vmatpush1.msra.mxu0 0.0
  %1378 = vmatprep.subr.mxu0 0.0
  %1379 = vmatpush1.msra.mxu0 0.0
  %1380 = vmatprep.subr.mxu0 0.0
  %1381 = vmatpush1.msra.mxu0 0.0
  %1382 = vmatprep.subr.mxu0 0.0
  %1383 = vmatpush1.msra.mxu0 0.0
  %1384 = vmatprep.subr.mxu0 0.0
  %1385 = vmatpush1.msra.mxu0 0.0
  %1386 = vmatprep.subr.mxu0 0.0
  %1387 = vmatpush1.msra.mxu0 0.0
  %1388 = vmatprep.subr.mxu0 0.0
  %1389 = vmatpush1.msra.mxu0 0.0
  %1390 = vmatprep.subr.mxu0 0.0
  %1391 = vmatpush1.msra.mxu0 0.0
  %1392 = vmatprep.subr.mxu0 0.0
  %1393 = vmatpush1.msra.mxu0 0.0
  %1394 = vmatprep.subr.mxu0 0.0
  %1395 = vmatpush1.msra.mxu0 0.0
  %1396 = vmatprep.subr.mxu0 0.0
  %1397 = vmatpush1.msra.mxu0 0.0
  %1398 = vmatprep.subr.mxu0 0.0
  %1399 = vmatpush1.msra.mxu0 0.0
  %1400 = vmatprep.subr.mxu0 0.0
  %1401 = vmatpush1.msra.mxu0 0.0
  %1402 = vmatprep.subr.mxu0 0.0
  %1403 = vmatpush1.msra.mxu0 0.0
  %1404 = vmatprep.subr.mxu0 0.0
  %1405 = vmatpush1.msra.mxu0 0.0
  %1406 = vmatprep.subr.mxu0 0.0
  %1407 = vmatpush1.msra.mxu0 0.0
  %1408 = vmatprep.subr.mxu0 0.0
  %1409 = vmatpush1.msra.mxu0 0.0
  %1410 = vmatprep.subr.mxu0 0.0
  %1411 = vmatpush1.msra.mxu0 0.0
  %1412 = vmatprep.subr.mxu0 0.0
  %1413 = vmatpush1.msra.mxu0 0.0
  %1414 = vmatprep.subr.mxu0 0.0
  %1415 = vmatpush1.msra.mxu0 0.0
  %1416 = vmatprep.subr.mxu0 0.0
  %1417 = vmatpush1.msra.mxu0 0.0
  %1418 = vmatprep.mubr.f32.mxu0 0.0
  %1419 = vmatmul.mubr.f32.gmra.mrb[0].mxu0 %v1352
  %v1420 = vpop.f32.mrb[0].mxu0
  %v1421 = vadd.f32 0.0, %v1420
  %v1422 = vpop.f32.mrb[0].mxu0
  %1423 = vdwg.mxu0
  %v1424 = vadd.f32 %v1345, %v1421
  %s1425 = scalar_lea.vmem %s5, 88
  %v1426 = vld [vmem:[%s1425] sm:$0xff]
  %v1427 = vrot.slane %v517, 3
  %v1428 = vrot.slane %v527, 2
  %v1429 = vsel %vm553, %v1428, %v1427
  %v1430 = vrot.slane %v537, 1
  %v1431 = vsel %vm556, %v1430, %v1429
  %v1432 = vsel %vm35, %v1431, 0
  %1434 = vmatprep.subr.mxu0 0.0
  %1435 = vmatpush1.msra.mxu0 %v1426
  %1436 = vmatprep.subr.mxu0 0.0
  %1437 = vmatpush1.msra.mxu0 0.0
  %1438 = vmatprep.subr.mxu0 0.0
  %1439 = vmatpush1.msra.mxu0 0.0
  %1440 = vmatprep.subr.mxu0 0.0
  %1441 = vmatpush1.msra.mxu0 0.0
  %1442 = vmatprep.subr.mxu0 0.0
  %1443 = vmatpush1.msra.mxu0 0.0
  %1444 = vmatprep.subr.mxu0 0.0
  %1445 = vmatpush1.msra.mxu0 0.0
  %1446 = vmatprep.subr.mxu0 0.0
  %1447 = vmatpush1.msra.mxu0 0.0
  %1448 = vmatprep.subr.mxu0 0.0
  %1449 = vmatpush1.msra.mxu0 0.0
  %1450 = vmatprep.subr.mxu0 0.0
  %1451 = vmatpush1.msra.mxu0 0.0
  %1452 = vmatprep.subr.mxu0 0.0
  %1453 = vmatpush1.msra.mxu0 0.0
  %1454 = vmatprep.subr.mxu0 0.0
  %1455 = vmatpush1.msra.mxu0 0.0
  %1456 = vmatprep.subr.mxu0 0.0
  %1457 = vmatpush1.msra.mxu0 0.0
  %1458 = vmatprep.subr.mxu0 0.0
  %1459 = vmatpush1.msra.mxu0 0.0
  %1460 = vmatprep.subr.mxu0 0.0
  %1461 = vmatpush1.msra.mxu0 0.0
  %1462 = vmatprep.subr.mxu0 0.0
  %1463 = vmatpush1.msra.mxu0 0.0
  %1464 = vmatprep.subr.mxu0 0.0
  %1465 = vmatpush1.msra.mxu0 0.0
  %1466 = vmatprep.subr.mxu0 0.0
  %1467 = vmatpush1.msra.mxu0 0.0
  %1468 = vmatprep.subr.mxu0 0.0
  %1469 = vmatpush1.msra.mxu0 0.0
  %1470 = vmatprep.subr.mxu0 0.0
  %1471 = vmatpush1.msra.mxu0 0.0
  %1472 = vmatprep.subr.mxu0 0.0
  %1473 = vmatpush1.msra.mxu0 0.0
  %1474 = vmatprep.subr.mxu0 0.0
  %1475 = vmatpush1.msra.mxu0 0.0
  %1476 = vmatprep.subr.mxu0 0.0
  %1477 = vmatpush1.msra.mxu0 0.0
  %1478 = vmatprep.subr.mxu0 0.0
  %1479 = vmatpush1.msra.mxu0 0.0
  %1480 = vmatprep.subr.mxu0 0.0
  %1481 = vmatpush1.msra.mxu0 0.0
  %1482 = vmatprep.subr.mxu0 0.0
  %1483 = vmatpush1.msra.mxu0 0.0
  %1484 = vmatprep.subr.mxu0 0.0
  %1485 = vmatpush1.msra.mxu0 0.0
  %1486 = vmatprep.subr.mxu0 0.0
  %1487 = vmatpush1.msra.mxu0 0.0
  %1488 = vmatprep.subr.mxu0 0.0
  %1489 = vmatpush1.msra.mxu0 0.0
  %1490 = vmatprep.subr.mxu0 0.0
  %1491 = vmatpush1.msra.mxu0 0.0
  %1492 = vmatprep.subr.mxu0 0.0
  %1493 = vmatpush1.msra.mxu0 0.0
  %1494 = vmatprep.subr.mxu0 0.0
  %1495 = vmatpush1.msra.mxu0 0.0
  %1496 = vmatprep.subr.mxu0 0.0
  %1497 = vmatpush1.msra.mxu0 0.0
  %1498 = vmatprep.mubr.f32.mxu0 0.0
  %1499 = vmatmul.mubr.f32.gmra.mrb[0].mxu0 %v1432
  %v1500 = vpop.f32.mrb[0].mxu0
  %v1501 = vadd.f32 0.0, %v1500
  %v1502 = vpop.f32.mrb[0].mxu0
  %1503 = vdwg.mxu0
  %v1504 = vadd.f32 %v1424, %v1501
  %s1505 = scalar_lea.vmem %s5, 96
  %v1506 = vld [vmem:[%s1505] sm:$0xff]
  %v1507 = vrot.slane %v517, 4
  %v1508 = vrot.slane %v527, 3
  %v1509 = vsel %vm553, %v1508, %v1507
  %v1510 = vrot.slane %v537, 2
  %v1511 = vsel %vm556, %v1510, %v1509
  %v1512 = vsel %vm35, %v1511, 0
  %1514 = vmatprep.subr.mxu0 0.0
  %1515 = vmatpush1.msra.mxu0 %v1506
  %1516 = vmatprep.subr.mxu0 0.0
  %1517 = vmatpush1.msra.mxu0 0.0
  %1518 = vmatprep.subr.mxu0 0.0
  %1519 = vmatpush1.msra.mxu0 0.0
  %1520 = vmatprep.subr.mxu0 0.0
  %1521 = vmatpush1.msra.mxu0 0.0
  %1522 = vmatprep.subr.mxu0 0.0
  %1523 = vmatpush1.msra.mxu0 0.0
  %1524 = vmatprep.subr.mxu0 0.0
  %1525 = vmatpush1.msra.mxu0 0.0
  %1526 = vmatprep.subr.mxu0 0.0
  %1527 = vmatpush1.msra.mxu0 0.0
  %1528 = vmatprep.subr.mxu0 0.0
  %1529 = vmatpush1.msra.mxu0 0.0
  %1530 = vmatprep.subr.mxu0 0.0
  %1531 = vmatpush1.msra.mxu0 0.0
  %1532 = vmatprep.subr.mxu0 0.0
  %1533 = vmatpush1.msra.mxu0 0.0
  %1534 = vmatprep.subr.mxu0 0.0
  %1535 = vmatpush1.msra.mxu0 0.0
  %1536 = vmatprep.subr.mxu0 0.0
  %1537 = vmatpush1.msra.mxu0 0.0
  %1538 = vmatprep.subr.mxu0 0.0
  %1539 = vmatpush1.msra.mxu0 0.0
  %1540 = vmatprep.subr.mxu0 0.0
  %1541 = vmatpush1.msra.mxu0 0.0
  %1542 = vmatprep.subr.mxu0 0.0
  %1543 = vmatpush1.msra.mxu0 0.0
  %1544 = vmatprep.subr.mxu0 0.0
  %1545 = vmatpush1.msra.mxu0 0.0
  %1546 = vmatprep.subr.mxu0 0.0
  %1547 = vmatpush1.msra.mxu0 0.0
  %1548 = vmatprep.subr.mxu0 0.0
  %1549 = vmatpush1.msra.mxu0 0.0
  %1550 = vmatprep.subr.mxu0 0.0
  %1551 = vmatpush1.msra.mxu0 0.0
  %1552 = vmatprep.subr.mxu0 0.0
  %1553 = vmatpush1.msra.mxu0 0.0
  %1554 = vmatprep.subr.mxu0 0.0
  %1555 = vmatpush1.msra.mxu0 0.0
  %1556 = vmatprep.subr.mxu0 0.0
  %1557 = vmatpush1.msra.mxu0 0.0
  %1558 = vmatprep.subr.mxu0 0.0
  %1559 = vmatpush1.msra.mxu0 0.0
  %1560 = vmatprep.subr.mxu0 0.0
  %1561 = vmatpush1.msra.mxu0 0.0
  %1562 = vmatprep.subr.mxu0 0.0
  %1563 = vmatpush1.msra.mxu0 0.0
  %1564 = vmatprep.subr.mxu0 0.0
  %1565 = vmatpush1.msra.mxu0 0.0
  %1566 = vmatprep.subr.mxu0 0.0
  %1567 = vmatpush1.msra.mxu0 0.0
  %1568 = vmatprep.subr.mxu0 0.0
  %1569 = vmatpush1.msra.mxu0 0.0
  %1570 = vmatprep.subr.mxu0 0.0
  %1571 = vmatpush1.msra.mxu0 0.0
  %1572 = vmatprep.subr.mxu0 0.0
  %1573 = vmatpush1.msra.mxu0 0.0
  %1574 = vmatprep.subr.mxu0 0.0
  %1575 = vmatpush1.msra.mxu0 0.0
  %1576 = vmatprep.subr.mxu0 0.0
  %1577 = vmatpush1.msra.mxu0 0.0
  %1578 = vmatprep.mubr.f32.mxu0 0.0
  %1579 = vmatmul.mubr.f32.gmra.mrb[0].mxu0 %v1512
  %v1580 = vpop.f32.mrb[0].mxu0
  %v1581 = vadd.f32 0.0, %v1580
  %v1582 = vpop.f32.mrb[0].mxu0
  %1583 = vdwg.mxu0
  %v1584 = vadd.f32 %v1504, %v1581
  %s1585 = scalar_lea.vmem %s5, 104
  %v1586 = vld [vmem:[%s1585] sm:$0xff]
  %v1587 = vrot.slane %v517, 5
  %v1588 = vrot.slane %v527, 4
  %v1589 = vsel %vm553, %v1588, %v1587
  %v1590 = vrot.slane %v537, 3
  %v1591 = vsel %vm556, %v1590, %v1589
  %v1592 = vsel %vm35, %v1591, 0
  %1594 = vmatprep.subr.mxu0 0.0
  %1595 = vmatpush1.msra.mxu0 %v1586
  %1596 = vmatprep.subr.mxu0 0.0
  %1597 = vmatpush1.msra.mxu0 0.0
  %1598 = vmatprep.subr.mxu0 0.0
  %1599 = vmatpush1.msra.mxu0 0.0
  %1600 = vmatprep.subr.mxu0 0.0
  %1601 = vmatpush1.msra.mxu0 0.0
  %1602 = vmatprep.subr.mxu0 0.0
  %1603 = vmatpush1.msra.mxu0 0.0
  %1604 = vmatprep.subr.mxu0 0.0
  %1605 = vmatpush1.msra.mxu0 0.0
  %1606 = vmatprep.subr.mxu0 0.0
  %1607 = vmatpush1.msra.mxu0 0.0
  %1608 = vmatprep.subr.mxu0 0.0
  %1609 = vmatpush1.msra.mxu0 0.0
  %1610 = vmatprep.subr.mxu0 0.0
  %1611 = vmatpush1.msra.mxu0 0.0
  %1612 = vmatprep.subr.mxu0 0.0
  %1613 = vmatpush1.msra.mxu0 0.0
  %1614 = vmatprep.subr.mxu0 0.0
  %1615 = vmatpush1.msra.mxu0 0.0
  %1616 = vmatprep.subr.mxu0 0.0
  %1617 = vmatpush1.msra.mxu0 0.0
  %1618 = vmatprep.subr.mxu0 0.0
  %1619 = vmatpush1.msra.mxu0 0.0
  %1620 = vmatprep.subr.mxu0 0.0
  %1621 = vmatpush1.msra.mxu0 0.0
  %1622 = vmatprep.subr.mxu0 0.0
  %1623 = vmatpush1.msra.mxu0 0.0
  %1624 = vmatprep.subr.mxu0 0.0
  %1625 = vmatpush1.msra.mxu0 0.0
  %1626 = vmatprep.subr.mxu0 0.0
  %1627 = vmatpush1.msra.mxu0 0.0
  %1628 = vmatprep.subr.mxu0 0.0
  %1629 = vmatpush1.msra.mxu0 0.0
  %1630 = vmatprep.subr.mxu0 0.0
  %1631 = vmatpush1.msra.mxu0 0.0
  %1632 = vmatprep.subr.mxu0 0.0
  %1633 = vmatpush1.msra.mxu0 0.0
  %1634 = vmatprep.subr.mxu0 0.0
  %1635 = vmatpush1.msra.mxu0 0.0
  %1636 = vmatprep.subr.mxu0 0.0
  %1637 = vmatpush1.msra.mxu0 0.0
  %1638 = vmatprep.subr.mxu0 0.0
  %1639 = vmatpush1.msra.mxu0 0.0
  %1640 = vmatprep.subr.mxu0 0.0
  %1641 = vmatpush1.msra.mxu0 0.0
  %1642 = vmatprep.subr.mxu0 0.0
  %1643 = vmatpush1.msra.mxu0 0.0
  %1644 = vmatprep.subr.mxu0 0.0
  %1645 = vmatpush1.msra.mxu0 0.0
  %1646 = vmatprep.subr.mxu0 0.0
  %1647 = vmatpush1.msra.mxu0 0.0
  %1648 = vmatprep.subr.mxu0 0.0
  %1649 = vmatpush1.msra.mxu0 0.0
  %1650 = vmatprep.subr.mxu0 0.0
  %1651 = vmatpush1.msra.mxu0 0.0
  %1652 = vmatprep.subr.mxu0 0.0
  %1653 = vmatpush1.msra.mxu0 0.0
  %1654 = vmatprep.subr.mxu0 0.0
  %1655 = vmatpush1.msra.mxu0 0.0
  %1656 = vmatprep.subr.mxu0 0.0
  %1657 = vmatpush1.msra.mxu0 0.0
  %1658 = vmatprep.mubr.f32.mxu0 0.0
  %1659 = vmatmul.mubr.f32.gmra.mrb[0].mxu0 %v1592
  %v1660 = vpop.f32.mrb[0].mxu0
  %v1661 = vadd.f32 0.0, %v1660
  %v1662 = vpop.f32.mrb[0].mxu0
  %1663 = vdwg.mxu0
  %v1664 = vadd.f32 %v1584, %v1661
  %s1665 = scalar_lea.vmem %s5, 112
  %v1666 = vld [vmem:[%s1665] sm:$0xff]
  %v1667 = vrot.slane %v517, 6
  %v1668 = vrot.slane %v527, 5
  %v1669 = vsel %vm553, %v1668, %v1667
  %v1670 = vrot.slane %v537, 4
  %v1671 = vsel %vm556, %v1670, %v1669
  %v1672 = vsel %vm35, %v1671, 0
  %1674 = vmatprep.subr.mxu0 0.0
  %1675 = vmatpush1.msra.mxu0 %v1666
  %1676 = vmatprep.subr.mxu0 0.0
  %1677 = vmatpush1.msra.mxu0 0.0
  %1678 = vmatprep.subr.mxu0 0.0
  %1679 = vmatpush1.msra.mxu0 0.0
  %1680 = vmatprep.subr.mxu0 0.0
  %1681 = vmatpush1.msra.mxu0 0.0
  %1682 = vmatprep.subr.mxu0 0.0
  %1683 = vmatpush1.msra.mxu0 0.0
  %1684 = vmatprep.subr.mxu0 0.0
  %1685 = vmatpush1.msra.mxu0 0.0
  %1686 = vmatprep.subr.mxu0 0.0
  %1687 = vmatpush1.msra.mxu0 0.0
  %1688 = vmatprep.subr.mxu0 0.0
  %1689 = vmatpush1.msra.mxu0 0.0
  %1690 = vmatprep.subr.mxu0 0.0
  %1691 = vmatpush1.msra.mxu0 0.0
  %1692 = vmatprep.subr.mxu0 0.0
  %1693 = vmatpush1.msra.mxu0 0.0
  %1694 = vmatprep.subr.mxu0 0.0
  %1695 = vmatpush1.msra.mxu0 0.0
  %1696 = vmatprep.subr.mxu0 0.0
  %1697 = vmatpush1.msra.mxu0 0.0
  %1698 = vmatprep.subr.mxu0 0.0
  %1699 = vmatpush1.msra.mxu0 0.0
  %1700 = vmatprep.subr.mxu0 0.0
  %1701 = vmatpush1.msra.mxu0 0.0
  %1702 = vmatprep.subr.mxu0 0.0
  %1703 = vmatpush1.msra.mxu0 0.0
  %1704 = vmatprep.subr.mxu0 0.0
  %1705 = vmatpush1.msra.mxu0 0.0
  %1706 = vmatprep.subr.mxu0 0.0
  %1707 = vmatpush1.msra.mxu0 0.0
  %1708 = vmatprep.subr.mxu0 0.0
  %1709 = vmatpush1.msra.mxu0 0.0
  %1710 = vmatprep.subr.mxu0 0.0
  %1711 = vmatpush1.msra.mxu0 0.0
  %1712 = vmatprep.subr.mxu0 0.0
  %1713 = vmatpush1.msra.mxu0 0.0
  %1714 = vmatprep.subr.mxu0 0.0
  %1715 = vmatpush1.msra.mxu0 0.0
  %1716 = vmatprep.subr.mxu0 0.0
  %1717 = vmatpush1.msra.mxu0 0.0
  %1718 = vmatprep.subr.mxu0 0.0
  %1719 = vmatpush1.msra.mxu0 0.0
  %1720 = vmatprep.subr.mxu0 0.0
  %1721 = vmatpush1.msra.mxu0 0.0
  %1722 = vmatprep.subr.mxu0 0.0
  %1723 = vmatpush1.msra.mxu0 0.0
  %1724 = vmatprep.subr.mxu0 0.0
  %1725 = vmatpush1.msra.mxu0 0.0
  %1726 = vmatprep.subr.mxu0 0.0
  %1727 = vmatpush1.msra.mxu0 0.0
  %1728 = vmatprep.subr.mxu0 0.0
  %1729 = vmatpush1.msra.mxu0 0.0
  %1730 = vmatprep.subr.mxu0 0.0
  %1731 = vmatpush1.msra.mxu0 0.0
  %1732 = vmatprep.subr.mxu0 0.0
  %1733 = vmatpush1.msra.mxu0 0.0
  %1734 = vmatprep.subr.mxu0 0.0
  %1735 = vmatpush1.msra.mxu0 0.0
  %1736 = vmatprep.subr.mxu0 0.0
  %1737 = vmatpush1.msra.mxu0 0.0
  %1738 = vmatprep.mubr.f32.mxu0 0.0
  %1739 = vmatmul.mubr.f32.gmra.mrb[0].mxu0 %v1672
  %v1740 = vpop.f32.mrb[0].mxu0
  %v1741 = vadd.f32 0.0, %v1740
  %v1742 = vpop.f32.mrb[0].mxu0
  %1743 = vdwg.mxu0
  %v1744 = vadd.f32 %v1664, %v1741
  %s1745 = scalar_lea.vmem %s5, 120
  %v1746 = vld [vmem:[%s1745] sm:$0xff]
  %v1747 = vrot.slane %v517, 7
  %v1748 = vrot.slane %v527, 6
  %v1749 = vsel %vm553, %v1748, %v1747
  %v1750 = vrot.slane %v537, 5
  %v1751 = vsel %vm556, %v1750, %v1749
  %v1752 = vsel %vm35, %v1751, 0
  %1754 = vmatprep.subr.mxu0 0.0
  %1755 = vmatpush1.msra.mxu0 %v1746
  %1756 = vmatprep.subr.mxu0 0.0
  %1757 = vmatpush1.msra.mxu0 0.0
  %1758 = vmatprep.subr.mxu0 0.0
  %1759 = vmatpush1.msra.mxu0 0.0
  %1760 = vmatprep.subr.mxu0 0.0
  %1761 = vmatpush1.msra.mxu0 0.0
  %1762 = vmatprep.subr.mxu0 0.0
  %1763 = vmatpush1.msra.mxu0 0.0
  %1764 = vmatprep.subr.mxu0 0.0
  %1765 = vmatpush1.msra.mxu0 0.0
  %1766 = vmatprep.subr.mxu0 0.0
  %1767 = vmatpush1.msra.mxu0 0.0
  %1768 = vmatprep.subr.mxu0 0.0
  %1769 = vmatpush1.msra.mxu0 0.0
  %1770 = vmatprep.subr.mxu0 0.0
  %1771 = vmatpush1.msra.mxu0 0.0
  %1772 = vmatprep.subr.mxu0 0.0
  %1773 = vmatpush1.msra.mxu0 0.0
  %1774 = vmatprep.subr.mxu0 0.0
  %1775 = vmatpush1.msra.mxu0 0.0
  %1776 = vmatprep.subr.mxu0 0.0
  %1777 = vmatpush1.msra.mxu0 0.0
  %1778 = vmatprep.subr.mxu0 0.0
  %1779 = vmatpush1.msra.mxu0 0.0
  %1780 = vmatprep.subr.mxu0 0.0
  %1781 = vmatpush1.msra.mxu0 0.0
  %1782 = vmatprep.subr.mxu0 0.0
  %1783 = vmatpush1.msra.mxu0 0.0
  %1784 = vmatprep.subr.mxu0 0.0
  %1785 = vmatpush1.msra.mxu0 0.0
  %1786 = vmatprep.subr.mxu0 0.0
  %1787 = vmatpush1.msra.mxu0 0.0
  %1788 = vmatprep.subr.mxu0 0.0
  %1789 = vmatpush1.msra.mxu0 0.0
  %1790 = vmatprep.subr.mxu0 0.0
  %1791 = vmatpush1.msra.mxu0 0.0
  %1792 = vmatprep.subr.mxu0 0.0
  %1793 = vmatpush1.msra.mxu0 0.0
  %1794 = vmatprep.subr.mxu0 0.0
  %1795 = vmatpush1.msra.mxu0 0.0
  %1796 = vmatprep.subr.mxu0 0.0
  %1797 = vmatpush1.msra.mxu0 0.0
  %1798 = vmatprep.subr.mxu0 0.0
  %1799 = vmatpush1.msra.mxu0 0.0
  %1800 = vmatprep.subr.mxu0 0.0
  %1801 = vmatpush1.msra.mxu0 0.0
  %1802 = vmatprep.subr.mxu0 0.0
  %1803 = vmatpush1.msra.mxu0 0.0
  %1804 = vmatprep.subr.mxu0 0.0
  %1805 = vmatpush1.msra.mxu0 0.0
  %1806 = vmatprep.subr.mxu0 0.0
  %1807 = vmatpush1.msra.mxu0 0.0
  %1808 = vmatprep.subr.mxu0 0.0
  %1809 = vmatpush1.msra.mxu0 0.0
  %1810 = vmatprep.subr.mxu0 0.0
  %1811 = vmatpush1.msra.mxu0 0.0
  %1812 = vmatprep.subr.mxu0 0.0
  %1813 = vmatpush1.msra.mxu0 0.0
  %1814 = vmatprep.subr.mxu0 0.0
  %1815 = vmatpush1.msra.mxu0 0.0
  %1816 = vmatprep.subr.mxu0 0.0
  %1817 = vmatpush1.msra.mxu0 0.0
  %1818 = vmatprep.mubr.f32.mxu0 0.0
  %1819 = vmatmul.mubr.f32.gmra.mrb[0].mxu0 %v1752
  %v1820 = vpop.f32.mrb[0].mxu0
  %v1821 = vadd.f32 0.0, %v1820
  %v1822 = vpop.f32.mrb[0].mxu0
  %1823 = vdwg.mxu0
  %v1824 = vadd.f32 %v1744, %v1821
  %v1825 = vld [vmem:[%s6] sm:$0x1]
  %v1827 = vlaneseq
  %v1828 = vshrl.u32 %v1827, 7
  %v1829 = vsub.s32 0, %v1828
  %v1830 = vrot.slane %v1825, %v1829
  %v1832 = vadd.f32 %v1824, %v1830
  %vm1833 = vcmask 57344
  %1834 = vst.msk [vmem:[%s7 + $0x10] sm:$0x1] %vm1833, %v1832
  %s1835 = scalar_lea.vmem %s7, 24
  %vm1836 = vcmask 58369
  %1837 = vst.msk [vmem:[%s1835 + $0xf] sm:$0x2] %vm1836, %v1832
  %s1838 = scalar_lea.vmem %s7, 48
  %vm1839 = vcmask 59394
  %1840 = vst.msk [vmem:[%s1838 + $0xe] sm:$0x4] %vm1839, %v1832
  %1842 = vrot.lane.b32.xlu0 %v1832, 120
  %v1843 = vpop.permute.xlu0 %1842
  %1845 = vst.msk [vmem:[%s7 + $0x11] sm:$0x1] %vm1833, %v1843
  %1846 = vst.msk [vmem:[%s1835 + $0x10] sm:$0x2] %vm1836, %v1843
  %1847 = vst.msk [vmem:[%s1838 + $0xf] sm:$0x4] %vm1839, %v1843
  %1848 = vrot.lane.b32.xlu0 %v1832, 112
  %v1849 = vpop.permute.xlu0 %1848
  %1851 = vst.msk [vmem:[%s7 + $0x12] sm:$0x1] %vm1833, %v1849
  %1852 = vst.msk [vmem:[%s1835 + $0x11] sm:$0x2] %vm1836, %v1849
  %1853 = vst.msk [vmem:[%s1838 + $0x10] sm:$0x4] %vm1839, %v1849
  %1854 = vrot.lane.b32.xlu0 %v1832, 104
  %v1855 = vpop.permute.xlu0 %1854
  %1857 = vst.msk [vmem:[%s7 + $0x13] sm:$0x1] %vm1833, %v1855
  %1858 = vst.msk [vmem:[%s1835 + $0x12] sm:$0x2] %vm1836, %v1855
  %1859 = vst.msk [vmem:[%s1838 + $0x11] sm:$0x4] %vm1839, %v1855
  %1860 = vrot.lane.b32.xlu0 %v1832, 96
  %v1861 = vpop.permute.xlu0 %1860
  %1863 = vst.msk [vmem:[%s7 + $0x14] sm:$0x1] %vm1833, %v1861
  %1864 = vst.msk [vmem:[%s1835 + $0x13] sm:$0x2] %vm1836, %v1861
  %1865 = vst.msk [vmem:[%s1838 + $0x12] sm:$0x4] %vm1839, %v1861
  %1866 = vrot.lane.b32.xlu0 %v1832, 88
  %v1867 = vpop.permute.xlu0 %1866
  %1869 = vst.msk [vmem:[%s7 + $0x15] sm:$0x1] %vm1833, %v1867
  %1870 = vst.msk [vmem:[%s1835 + $0x14] sm:$0x2] %vm1836, %v1867
  %1871 = vst.msk [vmem:[%s1838 + $0x13] sm:$0x4] %vm1839, %v1867
  %1872 = vrot.lane.b32.xlu0 %v1832, 80
  %v1873 = vpop.permute.xlu0 %1872
  %1875 = vst.msk [vmem:[%s7 + $0x16] sm:$0x1] %vm1833, %v1873
  %1876 = vst.msk [vmem:[%s1835 + $0x15] sm:$0x2] %vm1836, %v1873
  %1877 = vst.msk [vmem:[%s1838 + $0x14] sm:$0x4] %vm1839, %v1873
  %1878 = vrot.lane.b32.xlu0 %v1832, 72
  %v1879 = vpop.permute.xlu0 %1878
  %1881 = vst.msk [vmem:[%s7 + $0x17] sm:$0x1] %vm1833, %v1879
  %1882 = vst.msk [vmem:[%s1835 + $0x16] sm:$0x2] %vm1836, %v1879
  %1883 = vst.msk [vmem:[%s1838 + $0x15] sm:$0x4] %vm1839, %v1879
  // Predicated region
  $region30: #{tpu_custom_call.1} parent=0 // pred_check
    _
  $region31: #{tpu_custom_call.1} parent=0 // pred_check_branch
    %1885 = sbr.rel (0) target = $region33
  $region32: #{tpu_custom_call.1} parent=0 // pred_region
    _
  $region33: #{tpu_custom_call.1} parent=0 // pred_fallthru
    _
  // Predicated region
  $region34: #{tpu_custom_call.1} parent=0 // pred_check
    _
  $region35: #{tpu_custom_call.1} parent=0 // pred_check_branch
    %1887 = sbr.rel (0) target = $region37
  $region36: #{tpu_custom_call.1} parent=0 // pred_region
    _
  $region37: #{tpu_custom_call.1} parent=0 // pred_fallthru
    _

</llo_original>
